<compile_context>
chip_gen: v7x
topology: tpu7x:2x2x1
jax: 0.10.0
libtpu: 0.0.40
codegen_flags: <defaults>
</compile_context>

<pallas_src>
import functools

import jax
import jax.numpy as jnp
from jax.experimental import pallas as pl
from jax.experimental.pallas import tpu as pltpu

SUBVEC_LEN = 9
K = 16
INV_TEMPERATURE = 1.0
LANE = 128
GROUP_MAX = 16        # codebooks per group -> G*K = 256 MXU lanes at most


# ------------------------- runtime feature probes -------------------------- #

_BUFFERED_ONE_OK = None
_VMEM_LIMIT = None


def _buffered_one_supported():
    """Probe (once) whether BlockSpec(pipeline_mode=pl.Buffered(1)) works."""
    global _BUFFERED_ONE_OK
    if _BUFFERED_ONE_OK is not None:
        return _BUFFERED_ONE_OK
    try:
        if not hasattr(pl, "Buffered"):
            raise AttributeError("pl.Buffered unavailable")

        def probe(a_ref, c_ref, o_ref):
            o_ref[...] = a_ref[...] + c_ref[...]

        f = pl.pallas_call(
            probe,
            out_shape=jax.ShapeDtypeStruct((16, 128), jnp.float32),
            grid=(2,),
            in_specs=[
                pl.BlockSpec((8, 128), lambda i: (i, 0)),
                pl.BlockSpec((8, 128), lambda i: (0, 0),
                             pipeline_mode=pl.Buffered(buffer_count=1)),
            ],
            out_specs=pl.BlockSpec((8, 128), lambda i: (i, 0)),
        )
        got = jax.block_until_ready(
            f(jnp.zeros((16, 128), jnp.float32),
              jnp.ones((8, 128), jnp.float32)))
        _BUFFERED_ONE_OK = bool(jnp.all(got == 1.0))
    except Exception:
        _BUFFERED_ONE_OK = False
    return _BUFFERED_ONE_OK


def _vmem_limit_bytes():
    """~3/4 of physical VMEM (48 MiB on v7x, 96 MiB on v5e/v6e)."""
    global _VMEM_LIMIT
    if _VMEM_LIMIT is None:
        limit = 48 * 1024 * 1024
        try:
            cap = int(getattr(pltpu.get_tpu_info(), "vmem_capacity_bytes", 0))
            if cap > 0:
                limit = min(cap * 3 // 4, 96 * 1024 * 1024)
        except Exception:
            pass
        _VMEM_LIMIT = int(max(limit, 32 * 1024 * 1024))
    return _VMEM_LIMIT


# ----------------------------- Pallas kernel ------------------------------- #

def _amm_conv_kernel(*refs, add_residual, num_groups):
    """Fused AMM (soft-PQ) conv + BN(eval) [+ residual] + ReLU for one M tile.

    refs (in order):
      p_ref     (TM, C*9)      bf16 flat im2col patches
      w_ref     (NG, G*9, G*K) bf16 per-group block-diag 2t*centroids    (MXU)
      sq_ref    (NG, G*9, G)   bf16 -t block map: (p*p) -> -t*||p_c||^2  (MXU)
      bias_ref  (NG, 1, G*K)   f32  -t*||c_ck||^2
      gsum_ref  (G*K, G)       f32  one-hot per-codebook exp sums        (MXU)
      gbc_ref   (G, G*K)       f32  one-hot broadcast back over K lanes  (MXU)
      lut_ref   (NG, G*K, Pp)  bf16 BN-scale-folded LUT
      shift_ref (1, Pp)        f32  BN shift
      [res_ref  (TM, Pp)]      f32  residual tile (only when add_residual)
      o_ref     (TM, Pp)       f32
    """
    if add_residual:
        (p_ref, w_ref, sq_ref, bias_ref, gsum_ref, gbc_ref, lut_ref,
         shift_ref, res_ref, o_ref) = refs
    else:
        (p_ref, w_ref, sq_ref, bias_ref, gsum_ref, gbc_ref, lut_ref,
         shift_ref, o_ref) = refs

    gs = w_ref.shape[1]                       # G*9 patch columns per group
    tiny = jnp.finfo(jnp.float32).tiny
    acc = None
    # Few (<= C/16) statically-unrolled codebook-group iterations.
    for g in range(num_groups):
        p = p_ref[:, g * gs:(g + 1) * gs]                        # (TM, G*9)
        # True (<= 0) logits  -t*||p_c - c_ck||^2, entirely on the MXU:
        #   2t*(p_c . c_ck)  : dense per-group block-diag matmul (bf16)
        #   -t*||c_ck||^2    : precomputed f32 bias
        #   -t*||p_c||^2     : small (TM,G*9)@(G*9,G) matmul + one-hot
        #                      broadcast back over K lanes.  It is constant
        #                      over k (cancels exactly in the softmax); it
        #                      only keeps exp() from overflowing, so bf16
        #                      rounding here is harmless.
        logits = jnp.dot(p, w_ref[g], preferred_element_type=jnp.float32)
        sqn = jnp.dot(p * p, sq_ref[g], preferred_element_type=jnp.float32)
        logits = logits + jnp.dot(sqn, gbc_ref[...],
                                  preferred_element_type=jnp.float32)
        logits = logits + bias_ref[g]                            # (TM, G*K)

        # Per-codebook softmax, flat / lane-dense: exp on the EUP, group sums
        # and broadcast via one-hot matmuls (no reshapes / masked reductions).
        e = jnp.exp(logits)                                      # <= ~1
        s = jnp.dot(e, gsum_ref[...], preferred_element_type=jnp.float32)
        s = jnp.maximum(s, tiny)        # guard a fully-underflowed codebook
        r = pl.reciprocal(s, approx=True)                        # EUP slot
        rb = jnp.dot(r, gbc_ref[...], preferred_element_type=jnp.float32)
        attn = (e * rb).astype(jnp.bfloat16)                     # soft assign

        # LUT contraction (BN scale folded into lut), accumulated over groups.
        part = jnp.dot(attn, lut_ref[g], preferred_element_type=jnp.float32)
        acc = part if acc is None else acc + part

    y = acc + shift_ref[...]
    if add_residual:
        y = y + res_ref[...]
    o_ref[...] = jnp.maximum(y, 0.0)


# -------------------------------- wrapper ----------------------------------- #

def _choose_tile_m(m, tm_max=512):
    """M tile: multiple of 8, <= tm_max, preferring divisors of m (no padding
    copy) and a grid of >= 2 steps (v7x has 2 TensorCores; the 'parallel' M
    axis is what gets sharded across them)."""
    if m <= 16:
        return m
    start = min(tm_max, m // 2) // 8 * 8
    for t in range(start, 7, -8):
        if m % t == 0:
            return t
    half = -(-m // 2)
    return min(tm_max, -(-half // 8) * 8)


def _const_spec(arr):
    """BlockSpec for a grid-invariant operand; single-buffered if supported."""
    idx = (lambda i: (0, 0)) if arr.ndim == 2 else (lambda i: (0, 0, 0))
    if _buffered_one_supported():
        return pl.BlockSpec(arr.shape, idx,
                            pipeline_mode=pl.Buffered(buffer_count=1))
    return pl.BlockSpec(arr.shape, idx)


def amm_conv_bn_act(patches, ops, residual=None, *, tm_max=512):
    """One fused AMM conv + BN(eval) [+ residual] + ReLU.

    patches:  (M, C*9) flat im2col patches (any float dtype; cast to bf16).
    ops:      dict produced by _prepare_amm_conv.
    residual: optional (M, Pp) float32 (lane-padded).  Returns (M, Pp) float32.
    """
    M, CS = patches.shape
    NG = ops['num_groups']
    Pp = ops['lut'].shape[-1]
    add_residual = residual is not None

    patches = patches.astype(jnp.bfloat16)      # bf16 MXU operand + half DMA

    tm = _choose_tile_m(M, tm_max)
    grid_m = pl.cdiv(M, tm)
    m_pad = grid_m * tm
    if m_pad != M:                     # only when M has no friendly divisor
        patches = jnp.pad(patches, ((0, m_pad - M), (0, 0)))
        if add_residual:
            residual = jnp.pad(residual, ((0, m_pad - M), (0, 0)))

    in_specs = [pl.BlockSpec((tm, CS), lambda i: (i, 0))]        # patch stream
    args = [patches]
    for name in ('w', 'sqmap', 'bias', 'gsum', 'gbc', 'lut', 'shift'):
        in_specs.append(_const_spec(ops[name]))
        args.append(ops[name])
    if add_residual:
        in_specs.append(pl.BlockSpec((tm, Pp), lambda i: (i, 0)))
        args.append(residual)

    out = pl.pallas_call(
        functools.partial(_amm_conv_kernel, add_residual=add_residual,
                          num_groups=NG),
        out_shape=jax.ShapeDtypeStruct((m_pad, Pp), jnp.float32),
        grid=(grid_m,),
        in_specs=in_specs,
        out_specs=pl.BlockSpec((tm, Pp), lambda i: (i, 0)),
        compiler_params=pltpu.CompilerParams(
            dimension_semantics=("parallel",),
            vmem_limit_bytes=_vmem_limit_bytes()),
    )(*args)
    return out[:M] if m_pad != M else out


# ----------------------- host-side operand preparation --------------------- #

def _prepare_amm_conv(centroids, lut, scale, shift, inv_temp=INV_TEMPERATURE):
    """Precompute MXU operands: per-group block-diag weights, sq-map, biases,
    one-hot sum/broadcast maps and the BN-folded (lane-padded) LUT."""
    C, K_, S = centroids.shape
    P = lut.shape[-1]
    Pp = -(-P // LANE) * LANE
    f32, bf16 = jnp.float32, jnp.bfloat16

    # Codebook group size: largest divisor of C that is <= GROUP_MAX.
    G = 1
    for d in range(min(GROUP_MAX, C), 0, -1):
        if C % d == 0:
            G = d
            break
    NG = C // G

    cent = centroids.astype(f32)
    cent_g = cent.reshape(NG, G, K_, S)
    eyeG = jnp.eye(G, dtype=f32)

    # w[g, c*S+s, c*K+k] = 2*t*cent[g*G+c, k, s]   (block-diag within group)
    w_grp = (2.0 * inv_temp) * jnp.einsum('gcks,cd->gcsdk', cent_g, eyeG)
    w_grp = w_grp.reshape(NG, G * S, G * K_).astype(bf16)
    # sqmap[g, c*S+s, c] = -t   (maps p*p -> -t*||p_c||^2)
    sqmap = (-inv_temp) * jnp.kron(eyeG, jnp.ones((S, 1), f32))
    sqmap = jnp.broadcast_to(sqmap[None], (NG, G * S, G)).astype(bf16)
    # bias[g, 0, c*K+k] = -t*||c_ck||^2
    bias = (-inv_temp) * jnp.sum(cent_g * cent_g, axis=-1)       # (NG, G, K)
    bias = bias.reshape(NG, 1, G * K_).astype(f32)
    gsum = jnp.kron(eyeG, jnp.ones((K_, 1), f32))                # (G*K, G)
    gbc = jnp.kron(eyeG, jnp.ones((1, K_), f32))                 # (G, G*K)

    lut_s = lut.astype(f32) * scale.astype(f32)                  # fold BN scale
    lut_g = lut_s.reshape(NG, G * K_, P)
    lut_p = jnp.pad(lut_g, ((0, 0), (0, 0), (0, Pp - P))).astype(bf16)
    shift_p = jnp.pad(shift.astype(f32), ((0, 0), (0, Pp - P)))
    return dict(w=w_grp, sqmap=sqmap, bias=bias, gsum=gsum, gbc=gbc,
                lut=lut_p, shift=shift_p, num_groups=NG), Pp


def _im2col_3x3_nhwc(x, stride):
    """x: (B, H, W, C) NHWC, 3x3 kernel, pad 1 -> flat patches (B*OH*OW, C*9).

    Column ordering is c*9 + (ki*3 + kj), matching the block-diag weights.
    """
    B, H, W, C = x.shape
    OH = (H + 2 - 3) // stride + 1
    OW = (W + 2 - 3) // stride + 1
    xp = jnp.pad(x, ((0, 0), (1, 1), (1, 1), (0, 0)))
    cols = []
    for ki in range(3):
        for kj in range(3):
            cols.append(xp[:, ki:ki + stride * (OH - 1) + 1:stride,
                           kj:kj + stride * (OW - 1) + 1:stride, :])
    pat = jnp.stack(cols, axis=-1)                    # (B, OH, OW, C, 9)
    return pat.reshape(B * OH * OW, C * SUBVEC_LEN), (B, OH, OW)


def _fold_bn(gamma, beta, running_mean, running_var, eps=1e-5):
    scale = gamma / jnp.sqrt(running_var + eps)
    shift = beta - running_mean * scale
    return scale[None, :], shift[None, :]


def init_amm_basic_block_params(key, in_planes, planes):
    ks = jax.random.split(key, 12)
    # conv1: ncodebooks = in_planes * 9 // 9 = in_planes
    c1 = in_planes
    cent1 = 0.5 * jax.random.normal(ks[0], (c1, K, SUBVEC_LEN), jnp.float32)
    w1 = jax.random.normal(ks[1], (planes, in_planes, 3, 3), jnp.float32)
    w1 = w1 / jnp.sqrt(float(in_planes * 9))
    w1r = jnp.transpose(w1, (1, 2, 3, 0)).reshape(c1, SUBVEC_LEN, planes)
    lut1 = jnp.einsum('cks,csp->ckp', cent1, w1r).reshape(c1 * K, planes)
    scale1, shift1 = _fold_bn(
        1.0 + 0.1 * jax.random.normal(ks[2], (planes,), jnp.float32),
        0.1 * jax.random.normal(ks[3], (planes,), jnp.float32),
        0.1 * jax.random.normal(ks[4], (planes,), jnp.float32),
        jnp.abs(1.0 + 0.1 * jax.random.normal(ks[5], (planes,), jnp.float32)))
    # conv2: ncodebooks = planes
    c2 = planes
    cent2 = 0.5 * jax.random.normal(ks[6], (c2, K, SUBVEC_LEN), jnp.float32)
    w2 = jax.random.normal(ks[7], (planes, planes, 3, 3), jnp.float32)
    w2 = w2 / jnp.sqrt(float(planes * 9))
    w2r = jnp.transpose(w2, (1, 2, 3, 0)).reshape(c2, SUBVEC_LEN, planes)
    lut2 = jnp.einsum('cks,csp->ckp', cent2, w2r).reshape(c2 * K, planes)
    scale2, shift2 = _fold_bn(
        1.0 + 0.1 * jax.random.normal(ks[8], (planes,), jnp.float32),
        0.1 * jax.random.normal(ks[9], (planes,), jnp.float32),
        0.1 * jax.random.normal(ks[10], (planes,), jnp.float32),
        jnp.abs(1.0 + 0.1 * jax.random.normal(ks[11], (planes,), jnp.float32)))
    return dict(cent1=cent1, lut1=lut1, scale1=scale1, shift1=shift1,
                cent2=cent2, lut2=lut2, scale2=scale2, shift2=shift2)


# ------------------------------ block forward ------------------------------ #

def amm_basic_block(x, params, *, in_planes, planes, stride, option='A'):
    """Forward of AMMBasicBlock.  x: (B, in_planes, H, W) NCHW float32."""
    B, C, H, W = x.shape
    assert C == in_planes
    x_nhwc = jnp.transpose(x, (0, 2, 3, 1))

    ops1, Pp = _prepare_amm_conv(params['cent1'], params['lut1'],
                                 params['scale1'], params['shift1'])
    ops2, Pp2 = _prepare_amm_conv(params['cent2'], params['lut2'],
                                  params['scale2'], params['shift2'])
    assert Pp == Pp2

    # conv1 + bn1 + relu (no residual -> no zero-residual DMA)
    pat1, (B1, OH1, OW1) = _im2col_3x3_nhwc(x_nhwc, stride)
    out1 = amm_conv_bn_act(pat1, ops1)                           # (M1, Pp)
    out1_nhwc = out1[:, :planes].reshape(B1, OH1, OW1, planes)

    # shortcut (option A: ::2 spatial subsample + zero-pad channels, exactly
    # as the original LambdaLayer); built directly lane-padded to Pp channels.
    if stride != 1 or in_planes != planes:
        assert option == 'A'  # TODO(synk): option 'B' (1x1 conv) not implemented
        sc = x_nhwc[:, ::2, ::2, :]
        pad_lo = planes // 4
        sc = jnp.pad(sc, ((0, 0), (0, 0), (0, 0),
                          (pad_lo, Pp - in_planes - pad_lo)))
    else:
        sc = jnp.pad(x_nhwc, ((0, 0), (0, 0), (0, 0), (0, Pp - planes)))
    res = sc.reshape(-1, Pp)

    # conv2 + bn2 + add(shortcut) + relu
    pat2, (B2, OH2, OW2) = _im2col_3x3_nhwc(out1_nhwc, 1)
    out2 = amm_conv_bn_act(pat2, ops2, res)                      # (M2, Pp)
    out2 = out2[:, :planes].reshape(B2, OH2, OW2, planes)
    return jnp.transpose(out2, (0, 3, 1, 2))


# --------------------------- pure-JAX reference ---------------------------- #

def _reference_amm_conv(patches_flat, centroids, lut_flat, scale, shift,
                        residual, add_residual):
    C, K_, S = centroids.shape
    patches = patches_flat.reshape(-1, C, S)
    diff = patches[:, :, None, :] - centroids[None]
    dist = jnp.sum(diff * diff, axis=-1)
    attn = jax.nn.softmax(-dist * INV_TEMPERATURE, axis=-1)
    out = attn.reshape(-1, C * K_) @ lut_flat
    y = out * scale + shift
    if add_residual:
        y = y + residual
    return jnp.maximum(y, 0.0)


def reference_block(x, params, *, in_planes, planes, stride):
    x_nhwc = jnp.transpose(x, (0, 2, 3, 1))
    pat1, (B1, OH1, OW1) = _im2col_3x3_nhwc(x_nhwc, stride)
    out1 = _reference_amm_conv(pat1, params['cent1'], params['lut1'],
                               params['scale1'], params['shift1'], None, False)
    out1_nhwc = out1.reshape(B1, OH1, OW1, planes)
    if stride != 1 or in_planes != planes:
        sc = x_nhwc[:, ::2, ::2, :]
        pad_c = planes // 4
        sc = jnp.pad(sc, ((0, 0), (0, 0), (0, 0), (pad_c, pad_c)))
    else:
        sc = x_nhwc
    pat2, (B2, OH2, OW2) = _im2col_3x3_nhwc(out1_nhwc, 1)
    res = sc.reshape(B2 * OH2 * OW2, planes)
    out2 = _reference_amm_conv(pat2, params['cent2'], params['lut2'],
                               params['scale2'], params['shift2'], res, True)
    return jnp.transpose(out2.reshape(B2, OH2, OW2, planes), (0, 3, 1, 2))


# --------------------------------- main ------------------------------------ #

if __name__ == "__main__":
    in_planes, planes, stride = 4, 8, 2      # exercises the option-A shortcut
    B, H, W = 2, 16, 16

    key = jax.random.PRNGKey(0)
    kx, kp = jax.random.split(key)
    x = jax.random.normal(kx, (B, in_planes, H, W), jnp.float32)
    params = init_amm_basic_block_params(kp, in_planes, planes)

    # Resolve runtime feature probes once, outside the jit trace.
    _buffered_one_supported()
    _vmem_limit_bytes()

    fwd = jax.jit(functools.partial(amm_basic_block, in_planes=in_planes,
                                    planes=planes, stride=stride))
    out = fwd(x, params)
    jax.block_until_ready(out)

    ref = reference_block(x, params, in_planes=in_planes, planes=planes,
                          stride=stride)
    assert out.shape == (B, planes, H // stride, W // stride), out.shape
    # Tolerance covers bf16 MXU operands (patches / centroid weights / LUT)
    # and the EUP approximate softmax reciprocal, compounded across the two
    # stacked AMM convs, vs. the all-f32 reference.  Structural errors would
    # be O(1); this stays well below that.
    assert jnp.allclose(out, ref, atol=1e-1, rtol=1e-1), \
        float(jnp.max(jnp.abs(out - ref)))

    print("KERNEL_OK")
</pallas_src>

<mosaic_0001>
module attributes {stable_mosaic.version = 11 : i64} {
  func.func @probe(%arg0: i32, %arg1: memref<8x128xf32, #tpu.memory_space<vmem>>, %arg2: memref<8x128xf32, #tpu.memory_space<vmem>>, %arg3: memref<8x128xf32, #tpu.memory_space<vmem>>) attributes {dimension_semantics = [#tpu.dimension_semantics<arbitrary>], iteration_bounds = array<i64: 2>, scalar_prefetch = 0 : i64, scratch_operands = 0 : i64, tpu.core_type = #tpu.core_type<tc>, window_params = [{transform_indices = @transform_0, window_bounds = array<i64: 8, 128>}, {pipeline_mode = #tpu.pipeline_mode<synchronous>, transform_indices = @transform_1, window_bounds = array<i64: 8, 128>}, {transform_indices = @transform_2, window_bounds = array<i64: 8, 128>}]} {
    %c0 = arith.constant 0 : index
    %c0_0 = arith.constant 0 : index
    %0 = vector.load %arg1[%c0, %c0_0] : memref<8x128xf32, #tpu.memory_space<vmem>>, vector<8x128xf32>
    %c0_1 = arith.constant 0 : index
    %c0_2 = arith.constant 0 : index
    %1 = vector.load %arg2[%c0_1, %c0_2] : memref<8x128xf32, #tpu.memory_space<vmem>>, vector<8x128xf32>
    %2 = arith.addf %0, %1 : vector<8x128xf32>
    %c0_3 = arith.constant 0 : index
    %c0_4 = arith.constant 0 : index
    %3 = vector.load %arg3[%c0_3, %c0_4] : memref<8x128xf32, #tpu.memory_space<vmem>>, vector<8x128xf32>
    tpu.vector_store %arg3[%c0_3, %c0_4], %2 {strides = array<i32>} : memref<8x128xf32, #tpu.memory_space<vmem>>, vector<8x128xf32>,
    return
  }
  func.func @transform_0(%arg0: i32) -> (i32, i32) {
    %c0_i32 = arith.constant 0 : i32
    %c0_i32_0 = arith.constant 0 : i32
    return %arg0, %c0_i32 : i32, i32
  }
  func.func @transform_1(%arg0: i32) -> (i32, i32) {
    %c0_i32 = arith.constant 0 : i32
    %c0_i32_0 = arith.constant 0 : i32
    %c0_i32_1 = arith.constant 0 : i32
    return %c0_i32, %c0_i32_0 : i32, i32
  }
  func.func @transform_2(%arg0: i32) -> (i32, i32) {
    %c0_i32 = arith.constant 0 : i32
    %c0_i32_0 = arith.constant 0 : i32
    return %arg0, %c0_i32 : i32, i32
  }
}

module attributes {stable_mosaic.version = 11 : i64} {
  func.func @_amm_conv_kernel(%arg0: i32, %arg1: memref<64x36xbf16, #tpu.memory_space<vmem>>, %arg2: memref<1x36x64xbf16, #tpu.memory_space<vmem>>, %arg3: memref<1x36x4xbf16, #tpu.memory_space<vmem>>, %arg4: memref<1x1x64xf32, #tpu.memory_space<vmem>>, %arg5: memref<64x4xf32, #tpu.memory_space<vmem>>, %arg6: memref<4x64xf32, #tpu.memory_space<vmem>>, %arg7: memref<1x64x128xbf16, #tpu.memory_space<vmem>>, %arg8: memref<1x128xf32, #tpu.memory_space<vmem>>, %arg9: memref<64x128xf32, #tpu.memory_space<vmem>>) attributes {dimension_semantics = [#tpu.dimension_semantics<parallel>], iteration_bounds = array<i64: 2>, scalar_prefetch = 0 : i64, scratch_operands = 0 : i64, tpu.core_type = #tpu.core_type<tc>, window_params = [{transform_indices = @transform_0, window_bounds = array<i64: 64, 36>}, {pipeline_mode = #tpu.pipeline_mode<synchronous>, transform_indices = @transform_1, window_bounds = array<i64: 1, 36, 64>}, {pipeline_mode = #tpu.pipeline_mode<synchronous>, transform_indices = @transform_2, window_bounds = array<i64: 1, 36, 4>}, {pipeline_mode = #tpu.pipeline_mode<synchronous>, transform_indices = @transform_3, window_bounds = array<i64: 1, 1, 64>}, {pipeline_mode = #tpu.pipeline_mode<synchronous>, transform_indices = @transform_4, window_bounds = array<i64: 64, 4>}, {pipeline_mode = #tpu.pipeline_mode<synchronous>, transform_indices = @transform_5, window_bounds = array<i64: 4, 64>}, {pipeline_mode = #tpu.pipeline_mode<synchronous>, transform_indices = @transform_6, window_bounds = array<i64: 1, 64, 128>}, {pipeline_mode = #tpu.pipeline_mode<synchronous>, transform_indices = @transform_7, window_bounds = array<i64: 1, 128>}, {transform_indices = @transform_8, window_bounds = array<i64: 64, 128>}]} {
    %c0 = arith.constant 0 : index
    %c0_0 = arith.constant 0 : index
    %0 = vector.load %arg1[%c0, %c0_0] : memref<64x36xbf16, #tpu.memory_space<vmem>>, vector<64x36xbf16>
    %c0_1 = arith.constant 0 : index
    %c0_2 = arith.constant 0 : index
    %c0_3 = arith.constant 0 : index
    %1 = vector.load %arg2[%c0_1, %c0_2, %c0_3] : memref<1x36x64xbf16, #tpu.memory_space<vmem>>, vector<1x36x64xbf16>
    %2 = vector.shape_cast %1 : vector<1x36x64xbf16> to vector<36x64xbf16>
    %cst = arith.constant dense<0.000000e+00> : vector<64x64xf32>
    %3 = tpu.matmul %0, %2, %cst {dimension_numbers = #tpu.dot_dimension_numbers<[1], [0], [0], [1], [0, 0, 1, 1], [], []>} : vector<64x36xbf16>, vector<36x64xbf16>, vector<64x64xf32> -> vector<64x64xf32>
    %4 = arith.mulf %0, %0 : vector<64x36xbf16>
    %c0_4 = arith.constant 0 : index
    %c0_5 = arith.constant 0 : index
    %c0_6 = arith.constant 0 : index
    %5 = vector.load %arg3[%c0_4, %c0_5, %c0_6] : memref<1x36x4xbf16, #tpu.memory_space<vmem>>, vector<1x36x4xbf16>
    %6 = vector.shape_cast %5 : vector<1x36x4xbf16> to vector<36x4xbf16>
    %cst_7 = arith.constant dense<0.000000e+00> : vector<64x4xf32>
    %7 = tpu.matmul %4, %6, %cst_7 {dimension_numbers = #tpu.dot_dimension_numbers<[1], [0], [0], [1], [0, 0, 1, 1], [], []>} : vector<64x36xbf16>, vector<36x4xbf16>, vector<64x4xf32> -> vector<64x4xf32>
    %c0_8 = arith.constant 0 : index
    %c0_9 = arith.constant 0 : index
    %8 = vector.load %arg6[%c0_8, %c0_9] : memref<4x64xf32, #tpu.memory_space<vmem>>, vector<4x64xf32>
    %cst_10 = arith.constant dense<0.000000e+00> : vector<64x64xf32>
    %9 = tpu.matmul %7, %8, %cst_10 {dimension_numbers = #tpu.dot_dimension_numbers<[1], [0], [0], [1], [0, 0, 1, 1], [], []>} : vector<64x4xf32>, vector<4x64xf32>, vector<64x64xf32> -> vector<64x64xf32>
    %10 = arith.addf %3, %9 : vector<64x64xf32>
    %c0_11 = arith.constant 0 : index
    %c0_12 = arith.constant 0 : index
    %c0_13 = arith.constant 0 : index
    %11 = vector.load %arg4[%c0_11, %c0_12, %c0_13] : memref<1x1x64xf32, #tpu.memory_space<vmem>>, vector<1x1x64xf32>
    %12 = vector.shape_cast %11 : vector<1x1x64xf32> to vector<1x64xf32>
    %13 = vector.broadcast %12 : vector<1x64xf32> to vector<64x64xf32>
    %14 = arith.addf %10, %13 : vector<64x64xf32>
    %15 = math.exp %14 : vector<64x64xf32>
    %c0_14 = arith.constant 0 : index
    %c0_15 = arith.constant 0 : index
    %16 = vector.load %arg5[%c0_14, %c0_15] : memref<64x4xf32, #tpu.memory_space<vmem>>, vector<64x4xf32>
    %cst_16 = arith.constant dense<0.000000e+00> : vector<64x4xf32>
    %17 = tpu.matmul %15, %16, %cst_16 {dimension_numbers = #tpu.dot_dimension_numbers<[1], [0], [0], [1], [0, 0, 1, 1], [], []>} : vector<64x64xf32>, vector<64x4xf32>, vector<64x4xf32> -> vector<64x4xf32>
    %cst_17 = arith.constant 1.17549435E-38 : f32
    %18 = vector.broadcast %cst_17 : f32 to vector<64x4xf32>
    %19 = arith.maximumf %17, %18 : vector<64x4xf32>
    %20 = tpu.reciprocal %19 {approx = true} : vector<64x4xf32> -> vector<64x4xf32>
    %c0_18 = arith.constant 0 : index
    %c0_19 = arith.constant 0 : index
    %21 = vector.load %arg6[%c0_18, %c0_19] : memref<4x64xf32, #tpu.memory_space<vmem>>, vector<4x64xf32>
    %cst_20 = arith.constant dense<0.000000e+00> : vector<64x64xf32>
    %22 = tpu.matmul %20, %21, %cst_20 {dimension_numbers = #tpu.dot_dimension_numbers<[1], [0], [0], [1], [0, 0, 1, 1], [], []>} : vector<64x4xf32>, vector<4x64xf32>, vector<64x64xf32> -> vector<64x64xf32>
    %23 = arith.mulf %15, %22 : vector<64x64xf32>
    %24 = arith.truncf %23 : vector<64x64xf32> to vector<64x64xbf16>
    %c0_21 = arith.constant 0 : index
    %c0_22 = arith.constant 0 : index
    %c0_23 = arith.constant 0 : index
    %25 = vector.load %arg7[%c0_21, %c0_22, %c0_23] : memref<1x64x128xbf16, #tpu.memory_space<vmem>>, vector<1x64x128xbf16>
    %26 = vector.shape_cast %25 : vector<1x64x128xbf16> to vector<64x128xbf16>
    %cst_24 = arith.constant dense<0.000000e+00> : vector<64x128xf32>
    %27 = tpu.matmul %24, %26, %cst_24 {dimension_numbers = #tpu.dot_dimension_numbers<[1], [0], [0], [1], [0, 0, 1, 1], [], []>} : vector<64x64xbf16>, vector<64x128xbf16>, vector<64x128xf32> -> vector<64x128xf32>
    %c0_25 = arith.constant 0 : index
    %c0_26 = arith.constant 0 : index
    %28 = vector.load %arg8[%c0_25, %c0_26] : memref<1x128xf32, #tpu.memory_space<vmem>>, vector<1x128xf32>
    %29 = vector.broadcast %28 : vector<1x128xf32> to vector<64x128xf32>
    %30 = arith.addf %27, %29 : vector<64x128xf32>
    %cst_27 = arith.constant 0.000000e+00 : f32
    %31 = vector.broadcast %cst_27 : f32 to vector<64x128xf32>
    %32 = arith.maximumf %30, %31 : vector<64x128xf32>
    %c0_28 = arith.constant 0 : index
    %c0_29 = arith.constant 0 : index
    %33 = vector.load %arg9[%c0_28, %c0_29] : memref<64x128xf32, #tpu.memory_space<vmem>>, vector<64x128xf32>
    tpu.vector_store %arg9[%c0_28, %c0_29], %32 {strides = array<i32>} : memref<64x128xf32, #tpu.memory_space<vmem>>, vector<64x128xf32>,
    return
  }
  func.func @transform_0(%arg0: i32) -> (i32, i32) {
    %c0_i32 = arith.constant 0 : i32
    %c0_i32_0 = arith.constant 0 : i32
    return %arg0, %c0_i32 : i32, i32
  }
  func.func @transform_1(%arg0: i32) -> (i32, i32, i32) {
    %c0_i32 = arith.constant 0 : i32
    %c0_i32_0 = arith.constant 0 : i32
    %c0_i32_1 = arith.constant 0 : i32
    %c0_i32_2 = arith.constant 0 : i32
    return %c0_i32, %c0_i32_0, %c0_i32_1 : i32, i32, i32
  }
  func.func @transform_2(%arg0: i32) -> (i32, i32, i32) {
    %c0_i32 = arith.constant 0 : i32
    %c0_i32_0 = arith.constant 0 : i32
    %c0_i32_1 = arith.constant 0 : i32
    %c0_i32_2 = arith.constant 0 : i32
    return %c0_i32, %c0_i32_0, %c0_i32_1 : i32, i32, i32
  }
  func.func @transform_3(%arg0: i32) -> (i32, i32, i32) {
    %c0_i32 = arith.constant 0 : i32
    %c0_i32_0 = arith.constant 0 : i32
    %c0_i32_1 = arith.constant 0 : i32
    %c0_i32_2 = arith.constant 0 : i32
    return %c0_i32, %c0_i32_0, %c0_i32_1 : i32, i32, i32
  }
  func.func @transform_4(%arg0: i32) -> (i32, i32) {
    %c0_i32 = arith.constant 0 : i32
    %c0_i32_0 = arith.constant 0 : i32
    %c0_i32_1 = arith.constant 0 : i32
    return %c0_i32, %c0_i32_0 : i32, i32
  }
  func.func @transform_5(%arg0: i32) -> (i32, i32) {
    %c0_i32 = arith.constant 0 : i32
    %c0_i32_0 = arith.constant 0 : i32
    %c0_i32_1 = arith.constant 0 : i32
    return %c0_i32, %c0_i32_0 : i32, i32
  }
  func.func @transform_6(%arg0: i32) -> (i32, i32, i32) {
    %c0_i32 = arith.constant 0 : i32
    %c0_i32_0 = arith.constant 0 : i32
    %c0_i32_1 = arith.constant 0 : i32
    %c0_i32_2 = arith.constant 0 : i32
    return %c0_i32, %c0_i32_0, %c0_i32_1 : i32, i32, i32
  }
  func.func @transform_7(%arg0: i32) -> (i32, i32) {
    %c0_i32 = arith.constant 0 : i32
    %c0_i32_0 = arith.constant 0 : i32
    %c0_i32_1 = arith.constant 0 : i32
    return %c0_i32, %c0_i32_0 : i32, i32
  }
  func.func @transform_8(%arg0: i32) -> (i32, i32) {
    %c0_i32 = arith.constant 0 : i32
    %c0_i32_0 = arith.constant 0 : i32
    return %arg0, %c0_i32 : i32, i32
  }
}

module attributes {stable_mosaic.version = 11 : i64} {
  func.func @_amm_conv_kernel(%arg0: i32, %arg1: memref<64x72xbf16, #tpu.memory_space<vmem>>, %arg2: memref<1x72x128xbf16, #tpu.memory_space<vmem>>, %arg3: memref<1x72x8xbf16, #tpu.memory_space<vmem>>, %arg4: memref<1x1x128xf32, #tpu.memory_space<vmem>>, %arg5: memref<128x8xf32, #tpu.memory_space<vmem>>, %arg6: memref<8x128xf32, #tpu.memory_space<vmem>>, %arg7: memref<1x128x128xbf16, #tpu.memory_space<vmem>>, %arg8: memref<1x128xf32, #tpu.memory_space<vmem>>, %arg9: memref<64x128xf32, #tpu.memory_space<vmem>>, %arg10: memref<64x128xf32, #tpu.memory_space<vmem>>) attributes {dimension_semantics = [#tpu.dimension_semantics<parallel>], iteration_bounds = array<i64: 2>, scalar_prefetch = 0 : i64, scratch_operands = 0 : i64, tpu.core_type = #tpu.core_type<tc>, window_params = [{transform_indices = @transform_0, window_bounds = array<i64: 64, 72>}, {pipeline_mode = #tpu.pipeline_mode<synchronous>, transform_indices = @transform_1, window_bounds = array<i64: 1, 72, 128>}, {pipeline_mode = #tpu.pipeline_mode<synchronous>, transform_indices = @transform_2, window_bounds = array<i64: 1, 72, 8>}, {pipeline_mode = #tpu.pipeline_mode<synchronous>, transform_indices = @transform_3, window_bounds = array<i64: 1, 1, 128>}, {pipeline_mode = #tpu.pipeline_mode<synchronous>, transform_indices = @transform_4, window_bounds = array<i64: 128, 8>}, {pipeline_mode = #tpu.pipeline_mode<synchronous>, transform_indices = @transform_5, window_bounds = array<i64: 8, 128>}, {pipeline_mode = #tpu.pipeline_mode<synchronous>, transform_indices = @transform_6, window_bounds = array<i64: 1, 128, 128>}, {pipeline_mode = #tpu.pipeline_mode<synchronous>, transform_indices = @transform_7, window_bounds = array<i64: 1, 128>}, {transform_indices = @transform_8, window_bounds = array<i64: 64, 128>}, {transform_indices = @transform_9, window_bounds = array<i64: 64, 128>}]} {
    %c0 = arith.constant 0 : index
    %c0_0 = arith.constant 0 : index
    %0 = vector.load %arg1[%c0, %c0_0] : memref<64x72xbf16, #tpu.memory_space<vmem>>, vector<64x72xbf16>
    %c0_1 = arith.constant 0 : index
    %c0_2 = arith.constant 0 : index
    %c0_3 = arith.constant 0 : index
    %1 = vector.load %arg2[%c0_1, %c0_2, %c0_3] : memref<1x72x128xbf16, #tpu.memory_space<vmem>>, vector<1x72x128xbf16>
    %2 = vector.shape_cast %1 : vector<1x72x128xbf16> to vector<72x128xbf16>
    %cst = arith.constant dense<0.000000e+00> : vector<64x128xf32>
    %3 = tpu.matmul %0, %2, %cst {dimension_numbers = #tpu.dot_dimension_numbers<[1], [0], [0], [1], [0, 0, 1, 1], [], []>} : vector<64x72xbf16>, vector<72x128xbf16>, vector<64x128xf32> -> vector<64x128xf32>
    %4 = arith.mulf %0, %0 : vector<64x72xbf16>
    %c0_4 = arith.constant 0 : index
    %c0_5 = arith.constant 0 : index
    %c0_6 = arith.constant 0 : index
    %5 = vector.load %arg3[%c0_4, %c0_5, %c0_6] : memref<1x72x8xbf16, #tpu.memory_space<vmem>>, vector<1x72x8xbf16>
    %6 = vector.shape_cast %5 : vector<1x72x8xbf16> to vector<72x8xbf16>
    %cst_7 = arith.constant dense<0.000000e+00> : vector<64x8xf32>
    %7 = tpu.matmul %4, %6, %cst_7 {dimension_numbers = #tpu.dot_dimension_numbers<[1], [0], [0], [1], [0, 0, 1, 1], [], []>} : vector<64x72xbf16>, vector<72x8xbf16>, vector<64x8xf32> -> vector<64x8xf32>
    %c0_8 = arith.constant 0 : index
    %c0_9 = arith.constant 0 : index
    %8 = vector.load %arg6[%c0_8, %c0_9] : memref<8x128xf32, #tpu.memory_space<vmem>>, vector<8x128xf32>
    %cst_10 = arith.constant dense<0.000000e+00> : vector<64x128xf32>
    %9 = tpu.matmul %7, %8, %cst_10 {dimension_numbers = #tpu.dot_dimension_numbers<[1], [0], [0], [1], [0, 0, 1, 1], [], []>} : vector<64x8xf32>, vector<8x128xf32>, vector<64x128xf32> -> vector<64x128xf32>
    %10 = arith.addf %3, %9 : vector<64x128xf32>
    %c0_11 = arith.constant 0 : index
    %c0_12 = arith.constant 0 : index
    %c0_13 = arith.constant 0 : index
    %11 = vector.load %arg4[%c0_11, %c0_12, %c0_13] : memref<1x1x128xf32, #tpu.memory_space<vmem>>, vector<1x1x128xf32>
    %12 = vector.shape_cast %11 : vector<1x1x128xf32> to vector<1x128xf32>
    %13 = vector.broadcast %12 : vector<1x128xf32> to vector<64x128xf32>
    %14 = arith.addf %10, %13 : vector<64x128xf32>
    %15 = math.exp %14 : vector<64x128xf32>
    %c0_14 = arith.constant 0 : index
    %c0_15 = arith.constant 0 : index
    %16 = vector.load %arg5[%c0_14, %c0_15] : memref<128x8xf32, #tpu.memory_space<vmem>>, vector<128x8xf32>
    %cst_16 = arith.constant dense<0.000000e+00> : vector<64x8xf32>
    %17 = tpu.matmul %15, %16, %cst_16 {dimension_numbers = #tpu.dot_dimension_numbers<[1], [0], [0], [1], [0, 0, 1, 1], [], []>} : vector<64x128xf32>, vector<128x8xf32>, vector<64x8xf32> -> vector<64x8xf32>
    %cst_17 = arith.constant 1.17549435E-38 : f32
    %18 = vector.broadcast %cst_17 : f32 to vector<64x8xf32>
    %19 = arith.maximumf %17, %18 : vector<64x8xf32>
    %20 = tpu.reciprocal %19 {approx = true} : vector<64x8xf32> -> vector<64x8xf32>
    %c0_18 = arith.constant 0 : index
    %c0_19 = arith.constant 0 : index
    %21 = vector.load %arg6[%c0_18, %c0_19] : memref<8x128xf32, #tpu.memory_space<vmem>>, vector<8x128xf32>
    %cst_20 = arith.constant dense<0.000000e+00> : vector<64x128xf32>
    %22 = tpu.matmul %20, %21, %cst_20 {dimension_numbers = #tpu.dot_dimension_numbers<[1], [0], [0], [1], [0, 0, 1, 1], [], []>} : vector<64x8xf32>, vector<8x128xf32>, vector<64x128xf32> -> vector<64x128xf32>
    %23 = arith.mulf %15, %22 : vector<64x128xf32>
    %24 = arith.truncf %23 : vector<64x128xf32> to vector<64x128xbf16>
    %c0_21 = arith.constant 0 : index
    %c0_22 = arith.constant 0 : index
    %c0_23 = arith.constant 0 : index
    %25 = vector.load %arg7[%c0_21, %c0_22, %c0_23] : memref<1x128x128xbf16, #tpu.memory_space<vmem>>, vector<1x128x128xbf16>
    %26 = vector.shape_cast %25 : vector<1x128x128xbf16> to vector<128x128xbf16>
    %cst_24 = arith.constant dense<0.000000e+00> : vector<64x128xf32>
    %27 = tpu.matmul %24, %26, %cst_24 {dimension_numbers = #tpu.dot_dimension_numbers<[1], [0], [0], [1], [0, 0, 1, 1], [], []>} : vector<64x128xbf16>, vector<128x128xbf16>, vector<64x128xf32> -> vector<64x128xf32>
    %c0_25 = arith.constant 0 : index
    %c0_26 = arith.constant 0 : index
    %28 = vector.load %arg8[%c0_25, %c0_26] : memref<1x128xf32, #tpu.memory_space<vmem>>, vector<1x128xf32>
    %29 = vector.broadcast %28 : vector<1x128xf32> to vector<64x128xf32>
    %30 = arith.addf %27, %29 : vector<64x128xf32>
    %c0_27 = arith.constant 0 : index
    %c0_28 = arith.constant 0 : index
    %31 = vector.load %arg9[%c0_27, %c0_28] : memref<64x128xf32, #tpu.memory_space<vmem>>, vector<64x128xf32>
    %32 = arith.addf %30, %31 : vector<64x128xf32>
    %cst_29 = arith.constant 0.000000e+00 : f32
    %33 = vector.broadcast %cst_29 : f32 to vector<64x128xf32>
    %34 = arith.maximumf %32, %33 : vector<64x128xf32>
    %c0_30 = arith.constant 0 : index
    %c0_31 = arith.constant 0 : index
    %35 = vector.load %arg10[%c0_30, %c0_31] : memref<64x128xf32, #tpu.memory_space<vmem>>, vector<64x128xf32>
    tpu.vector_store %arg10[%c0_30, %c0_31], %34 {strides = array<i32>} : memref<64x128xf32, #tpu.memory_space<vmem>>, vector<64x128xf32>,
    return
  }
  func.func @transform_0(%arg0: i32) -> (i32, i32) {
    %c0_i32 = arith.constant 0 : i32
    %c0_i32_0 = arith.constant 0 : i32
    return %arg0, %c0_i32 : i32, i32
  }
  func.func @transform_1(%arg0: i32) -> (i32, i32, i32) {
    %c0_i32 = arith.constant 0 : i32
    %c0_i32_0 = arith.constant 0 : i32
    %c0_i32_1 = arith.constant 0 : i32
    %c0_i32_2 = arith.constant 0 : i32
    return %c0_i32, %c0_i32_0, %c0_i32_1 : i32, i32, i32
  }
  func.func @transform_2(%arg0: i32) -> (i32, i32, i32) {
    %c0_i32 = arith.constant 0 : i32
    %c0_i32_0 = arith.constant 0 : i32
    %c0_i32_1 = arith.constant 0 : i32
    %c0_i32_2 = arith.constant 0 : i32
    return %c0_i32, %c0_i32_0, %c0_i32_1 : i32, i32, i32
  }
  func.func @transform_3(%arg0: i32) -> (i32, i32, i32) {
    %c0_i32 = arith.constant 0 : i32
    %c0_i32_0 = arith.constant 0 : i32
    %c0_i32_1 = arith.constant 0 : i32
    %c0_i32_2 = arith.constant 0 : i32
    return %c0_i32, %c0_i32_0, %c0_i32_1 : i32, i32, i32
  }
  func.func @transform_4(%arg0: i32) -> (i32, i32) {
    %c0_i32 = arith.constant 0 : i32
    %c0_i32_0 = arith.constant 0 : i32
    %c0_i32_1 = arith.constant 0 : i32
    return %c0_i32, %c0_i32_0 : i32, i32
  }
  func.func @transform_5(%arg0: i32) -> (i32, i32) {
    %c0_i32 = arith.constant 0 : i32
    %c0_i32_0 = arith.constant 0 : i32
    %c0_i32_1 = arith.constant 0 : i32
    return %c0_i32, %c0_i32_0 : i32, i32
  }
  func.func @transform_6(%arg0: i32) -> (i32, i32, i32) {
    %c0_i32 = arith.constant 0 : i32
    %c0_i32_0 = arith.constant 0 : i32
    %c0_i32_1 = arith.constant 0 : i32
    %c0_i32_2 = arith.constant 0 : i32
    return %c0_i32, %c0_i32_0, %c0_i32_1 : i32, i32, i32
  }
  func.func @transform_7(%arg0: i32) -> (i32, i32) {
    %c0_i32 = arith.constant 0 : i32
    %c0_i32_0 = arith.constant 0 : i32
    %c0_i32_1 = arith.constant 0 : i32
    return %c0_i32, %c0_i32_0 : i32, i32
  }
  func.func @transform_8(%arg0: i32) -> (i32, i32) {
    %c0_i32 = arith.constant 0 : i32
    %c0_i32_0 = arith.constant 0 : i32
    return %arg0, %c0_i32 : i32, i32
  }
  func.func @transform_9(%arg0: i32) -> (i32, i32) {
    %c0_i32 = arith.constant 0 : i32
    %c0_i32_0 = arith.constant 0 : i32
    return %arg0, %c0_i32 : i32, i32
  }
}

</mosaic_0001>

<llo_original>
// kernel: tpu_custom_call.1
$region0: #{tpu_custom_call.1}
  #allocation0 [shape = 'u32[]', space=smem, size = 0x4, offset = 0x4, fixed_abs, tag = 'smem constant byte address 0x4 - core index']
  #allocation1 [shape = 'u32[144,128]{1,0:T(1,128)}', space=vmem, size = 0x12000, scoped, tag = 'internal scratch']
  %s0 = inlined_call_operand.hbm [shape: f32[16,128], index: 0, kind: input, shape index: {}]
  %s1 = inlined_call_operand.hbm [shape: f32[8,128], index: 1, kind: input, shape index: {}]
  %s2 = inlined_call_operand.hbm [shape: f32[16,128], index: 2, kind: output, shape index: {}]
  %s3 = sld [smem:[#allocation0]]
  $region49: #{tpu_custom_call.1} parent=0
    _
  %s5 = ssub.s32 1, %s3
  %s6 = scalar_select 0, %s5, %s3
  $region1: #{tpu_custom_call.1} parent=0
    #allocation2 [shape = 'u8[8192]{0}', space=vmem, size = 0x2000, scoped, tag = 'input window, operand 0']
    #allocation3 [shape = 's32[2]{0}', space=sflag, size = 0x8, scoped, tag = 'scoped memory for tpu_custom_call.1']
    #allocation4 [shape = 's32[2]{0}', space=sflag, size = 0x8, scoped, tag = 'scoped memory for tpu_custom_call.1']
    #allocation5 [shape = 'u8[4096]{0}', space=vmem, size = 0x1000, scoped, tag = 'input window, operand 1, single buffered']
    #allocation6 [shape = 's32[1]{0}', space=sflag, size = 0x4, scoped, tag = 'scoped memory for tpu_custom_call.1']
    #allocation7 [shape = 'u8[8192]{0}', space=vmem, size = 0x2000, scoped, tag = 'output window, operand 0']
    %7 = vsyncpa [#allocation3], 0
    %s8 = scalar_lea.sflag [#allocation3], 1
    %9 = vsyncpa %s8, 0
    %10 = vsyncpa [#allocation6], 0
    %11 = vsyncpa [#allocation4], 0
    %s12 = scalar_lea.sflag [#allocation4], 1
    %13 = vsyncpa %s12, 0
    loop: start=0, step=1, limit=4
    $region2: #{tpu_custom_call.1} parent=1 // loop_pre_header
      _
    $region3: #{tpu_custom_call.1} parent=1 // loop_header
      %s15 = sphi 0, %s19
      %p16 = scmp.ge.s32.totalorder %s15, 4
      %s25 = sphi 0, %s27
      %s28 = sphi 0, %s25
      %s29 = sphi 0, %s28
      %s45 = sphi 0, %s29
      %s49 = sphi 0, %s49
      %s51 = sphi 0, %s49
      %s52 = sphi 0, %s51
      %s66 = sphi 0, %s52
      %s72 = sphi 0, %s74
      %s75 = sphi 0, %s72
      %s76 = sphi 0, %s75
      %s92 = sphi 0, %s76
    $region4: #{tpu_custom_call.1} parent=1 // loop_header_branch
      %18 = sbr.rel (%p16) target = $region8
    $region5: #{tpu_custom_call.1} parent=1 // loop_body
      %s20 = ssub.s32 %s15, 1
      %s21 = ssub.s32 %s15, 2
      %s22 = sadd.s32 %s15, 1
      %s23 = ssub.s32 %s15, %s22
      %p24 = scmp.eq.s32.totalorder %s23, 0
      %s26 = sadd.s32 %s25, 1
      %s27 = scalar_select %p24, %s25, %s26
      %p30 = pneg %p24
      %p31 = scmp.eq.s32.totalorder %s15, 1
      %p32 = por %p30, %p31
      %p33 = scmp.ne.s32.totalorder %s25, %s28
      %p34 = scmp.eq.s32.totalorder %s15, 0
      %p35 = por %p33, %p34
      %p36 = scmp.ne.s32.totalorder %s25, %s28
      %p37 = scmp.eq.s32.totalorder %s20, 1
      %p38 = por %p36, %p37
      %p39 = scmp.ne.s32.totalorder %s28, %s29
      %p40 = scmp.eq.s32.totalorder %s20, 0
      %p41 = por %p39, %p40
      %p42 = scmp.ne.s32.totalorder %s28, %s29
      %p43 = scmp.eq.s32.totalorder %s21, 1
      %p44 = por %p42, %p43
      %p46 = scmp.ne.s32.totalorder %s29, %s45
      %p47 = scmp.eq.s32.totalorder %s21, 0
      %p48 = por %p46, %p47
      %s50 = sadd.s32 %s49, 1
      %p53 = scmp.eq.s32.totalorder %s15, 1
      %p54 = scmp.ne.s32.totalorder %s49, %s51
      %p55 = scmp.eq.s32.totalorder %s15, 0
      %p56 = por %p54, %p55
      %p57 = scmp.ne.s32.totalorder %s49, %s51
      %p58 = scmp.eq.s32.totalorder %s20, 1
      %p59 = por %p57, %p58
      %p60 = scmp.ne.s32.totalorder %s51, %s52
      %p61 = scmp.eq.s32.totalorder %s20, 0
      %p62 = por %p60, %p61
      %p63 = scmp.ne.s32.totalorder %s51, %s52
      %p64 = scmp.eq.s32.totalorder %s21, 1
      %p65 = por %p63, %p64
      %p67 = scmp.ne.s32.totalorder %s52, %s66
      %p68 = scmp.eq.s32.totalorder %s21, 0
      %p69 = por %p67, %p68
      %s70 = ssub.s32 %s15, %s22
      %p71 = scmp.eq.s32.totalorder %s70, 0
      %s73 = sadd.s32 %s72, 1
      %s74 = scalar_select %p71, %s72, %s73
      %p77 = pneg %p71
      %p78 = scmp.eq.s32.totalorder %s15, 1
      %p79 = por %p77, %p78
      %p80 = scmp.ne.s32.totalorder %s72, %s75
      %p81 = scmp.eq.s32.totalorder %s15, 0
      %p82 = por %p80, %p81
      %p83 = scmp.ne.s32.totalorder %s72, %s75
      %p84 = scmp.eq.s32.totalorder %s20, 1
      %p85 = por %p83, %p84
      %p86 = scmp.ne.s32.totalorder %s75, %s76
      %p87 = scmp.eq.s32.totalorder %s20, 0
      %p88 = por %p86, %p87
      %p89 = scmp.ne.s32.totalorder %s75, %s76
      %p90 = scmp.eq.s32.totalorder %s21, 1
      %p91 = por %p89, %p90
      %p93 = scmp.ne.s32.totalorder %s76, %s92
      %p94 = scmp.eq.s32.totalorder %s21, 0
      %p95 = por %p93, %p94
      %p96 = scmp.le.s32.totalorder 1, %s15
      %p97 = scmp.lt.s32.totalorder %s15, 3
      %p98 = pnand %p96, %p97
      %p99 = pneg %p98
      // Predicated region
      $region9: #{tpu_custom_call.1} parent=5 // pred_check
        _
      $region10: #{tpu_custom_call.1} parent=5 // pred_check_branch
        %101 = sbr.rel (%p98) target = $region12
      $region11: #{tpu_custom_call.1} parent=5 // pred_region
        %s102 = ssub.s32 %s15, 1
        // Predicated region
        $region13: #{tpu_custom_call.1} parent=11 // pred_check
          %p103 = pneg %p62
        $region14: #{tpu_custom_call.1} parent=11 // pred_check_branch
          %105 = sbr.rel (%p103) target = $region16
        $region15: #{tpu_custom_call.1} parent=11 // pred_region
          %s107 = ssub.s32 128, 128
          %108 = vsyncadd [#allocation6], %s107
          %s110 = sshll.u32 [#allocation5], 4
          %s111 = int_to_ptr.vmem [resolvable:$true] %s110
          %113 = dma.hbm_to_vmem [thread:$0]  %s1, 128, %s111, [#allocation6]
        $region16: #{tpu_custom_call.1} parent=11 // pred_fallthru
          _
      $region12: #{tpu_custom_call.1} parent=5 // pred_fallthru
        _
      %p114 = scmp.lt.s32.totalorder %s15, 2
      // Predicated region
      $region17: #{tpu_custom_call.1} parent=5 // pred_check
        %p115 = pneg %p114
      $region18: #{tpu_custom_call.1} parent=5 // pred_check_branch
        %117 = sbr.rel (%p115) target = $region20
      $region19: #{tpu_custom_call.1} parent=5 // pred_region
        // Predicated region
        $region21: #{tpu_custom_call.1} parent=19 // pred_check
          %p118 = pneg %p35
        $region22: #{tpu_custom_call.1} parent=19 // pred_check_branch
          %120 = sbr.rel (%p118) target = $region24
        $region23: #{tpu_custom_call.1} parent=19 // pred_region
          %s121 = sand.u32 %s25, 1
          %s122 = scalar_lea.sflag [#allocation3], %s121
          %s123 = sand.u32 %s25, 1
          %s124 = smul.addr %s123, 8
          %s125 = scalar_lea.vmem [#allocation2], %s124
          %s127 = ssub.s32 128, 128
          %128 = vsyncadd %s122, %s127
          %s129 = smul.addr %s15, 128
          %s130 = scalar_lea.hbm %s0, %s129
          %s132 = sshll.u32 %s125, 4
          %s133 = int_to_ptr.vmem [resolvable:$true] %s132
          %135 = dma.hbm_to_vmem [thread:$0]  %s130, 128, %s133, %s122
        $region24: #{tpu_custom_call.1} parent=19 // pred_fallthru
          _
      $region20: #{tpu_custom_call.1} parent=5 // pred_fallthru
        _
      %p136 = scmp.le.s32.totalorder 1, %s15
      %p137 = scmp.lt.s32.totalorder %s15, 3
      %p138 = pnand %p136, %p137
      %p139 = pneg %p138
      // Predicated region
      $region25: #{tpu_custom_call.1} parent=5 // pred_check
        _
      $region26: #{tpu_custom_call.1} parent=5 // pred_check_branch
        %141 = sbr.rel (%p138) target = $region28
      $region27: #{tpu_custom_call.1} parent=5 // pred_region
        %s142 = ssub.s32 %s15, 1
        %s143 = sand.u32 %s28, 1
        %s144 = scalar_lea.sflag [#allocation3], %s143
        %s145 = sand.u32 %s28, 1
        %s146 = smul.addr %s145, 8
        %s147 = scalar_lea.vmem [#allocation2], %s146
        // Predicated region
        $region29: #{tpu_custom_call.1} parent=27 // pred_check
          %p148 = pneg %p41
        $region30: #{tpu_custom_call.1} parent=27 // pred_check_branch
          %150 = sbr.rel (%p148) target = $region32
        $region31: #{tpu_custom_call.1} parent=27 // pred_region
          %151 = dma.done %s144, 128
        $region32: #{tpu_custom_call.1} parent=27 // pred_fallthru
          _
        // Predicated region
        $region33: #{tpu_custom_call.1} parent=27 // pred_check
          %p152 = pneg %p62
        $region34: #{tpu_custom_call.1} parent=27 // pred_check_branch
          %154 = sbr.rel (%p152) target = $region36
        $region35: #{tpu_custom_call.1} parent=27 // pred_region
          %155 = dma.done [#allocation6], 128
        $region36: #{tpu_custom_call.1} parent=27 // pred_fallthru
          _
        %s156 = sand.u32 %s28, 1
        %s157 = scalar_lea.sflag [#allocation3], %s156
        %s158 = sand.u32 %s28, 1
        %s159 = smul.addr %s158, 8
        %s160 = scalar_lea.vmem [#allocation2], %s159
        %p161 = pneg %p41
        %p162 = pneg %p38
        %p163 = pneg %p62
        %p164 = pneg %p59
        %p165 = pneg %p88
        %p166 = pneg %p85
        %s167 = sand.u32 %s75, 1
        %s168 = scalar_lea.sflag [#allocation4], %s167
        %s169 = sand.u32 %s75, 1
        %s170 = smul.addr %s169, 8
        %s171 = scalar_lea.vmem [#allocation7], %s170
        %v172 = vld [vmem:[%s147] sm:$0xff]
        %v173 = vld [vmem:[#allocation5] sm:$0xff]
        %v174 = vadd.f32 %v172, %v173
        %175 = vst [vmem:[%s171] sm:$0xff] %v174
        %s176 = sand.u32 %s75, 1
        %s177 = scalar_lea.sflag [#allocation4], %s176
        %s178 = sand.u32 %s75, 1
        %s179 = smul.addr %s178, 8
        %s180 = scalar_lea.vmem [#allocation7], %s179
        // Predicated region
        $region37: #{tpu_custom_call.1} parent=27 // pred_check
          %p181 = pneg %p85
        $region38: #{tpu_custom_call.1} parent=27 // pred_check_branch
          %183 = sbr.rel (%p181) target = $region40
        $region39: #{tpu_custom_call.1} parent=27 // pred_region
          %s185 = ssub.s32 128, 128
          %186 = vsyncadd %s177, %s185
          %s187 = smul.addr %s20, 128
          %s188 = scalar_lea.hbm %s2, %s187
          %s190 = sshll.u32 %s180, 4
          %s191 = int_to_ptr.vmem [resolvable:$true] %s190
          %193 = dma.vmem_to_hbm [thread:$0]  %s191, 128, %s188, %s177
        $region40: #{tpu_custom_call.1} parent=27 // pred_fallthru
          _
      $region28: #{tpu_custom_call.1} parent=5 // pred_fallthru
        _
      %p194 = scmp.le.s32.totalorder 2, %s15
      // Predicated region
      $region41: #{tpu_custom_call.1} parent=5 // pred_check
        %p195 = pneg %p194
      $region42: #{tpu_custom_call.1} parent=5 // pred_check_branch
        %197 = sbr.rel (%p195) target = $region44
      $region43: #{tpu_custom_call.1} parent=5 // pred_region
        %s198 = ssub.s32 %s15, 2
        // Predicated region
        $region45: #{tpu_custom_call.1} parent=43 // pred_check
          %p199 = pneg %p91
        $region46: #{tpu_custom_call.1} parent=43 // pred_check_branch
          %201 = sbr.rel (%p199) target = $region48
        $region47: #{tpu_custom_call.1} parent=43 // pred_region
          %s202 = sand.u32 %s76, 1
          %s203 = scalar_lea.sflag [#allocation4], %s202
          %s204 = sand.u32 %s76, 1
          %s205 = smul.addr %s204, 8
          %s206 = scalar_lea.vmem [#allocation7], %s205
          %207 = dma.done %s203, 128
        $region48: #{tpu_custom_call.1} parent=43 // pred_fallthru
          _
      $region44: #{tpu_custom_call.1} parent=5 // pred_fallthru
        _
    $region6: #{tpu_custom_call.1} parent=1 // loop_footer
      %s19 = sadd.s32 1, %s15
    $region7: #{tpu_custom_call.1} parent=1 // loop_footer_branch
      %14 = sbr.rel target = $region3
    $region8: #{tpu_custom_call.1} parent=1 // loop_exit
      _
    %208 = vsyncpa [#allocation3], 1
    %s209 = scalar_lea.sflag [#allocation3], 1
    %210 = vsyncpa %s209, 1
    %211 = vsyncpa [#allocation6], 1
    %212 = vsyncpa [#allocation4], 1
    %s213 = scalar_lea.sflag [#allocation4], 1
    %214 = vsyncpa %s213, 1

// kernel: amm_basic_block.2
$region0: #{amm_basic_block.2}
  #allocation0 [shape = 'u32[]', space=smem, size = 0x4, offset = 0x4, fixed_abs, tag = 'smem constant byte address 0x4 - core index']
  #allocation1 [shape = 'u32[144,128]{1,0:T(1,128)}', space=vmem, size = 0x12000, scoped, tag = 'internal scratch']
  %s0 = inlined_call_operand.vmem [shape: bf16[128,36], index: 0, kind: input, shape index: {}]
  %s1 = inlined_call_operand.vmem [shape: bf16[1,36,64], index: 1, kind: input, shape index: {}]
  %s2 = inlined_call_operand.vmem [shape: bf16[1,36,4], index: 2, kind: input, shape index: {}]
  %s3 = inlined_call_operand.vmem [shape: f32[1,1,64], index: 3, kind: input, shape index: {}]
  %s4 = inlined_call_operand.vmem [shape: f32[64,4], index: 4, kind: input, shape index: {}]
  %s5 = inlined_call_operand.vmem [shape: f32[4,64], index: 5, kind: input, shape index: {}]
  %s6 = inlined_call_operand.vmem [shape: bf16[1,64,128], index: 6, kind: input, shape index: {}]
  %s7 = inlined_call_operand.vmem [shape: f32[1,128], index: 7, kind: input, shape index: {}]
  %s8 = inlined_call_operand.vmem [shape: f32[128,128], index: 8, kind: output, shape index: {}]
  %s9 = sld [smem:[#allocation0]]
  $region65: #{amm_basic_block.2} parent=0
    _
  %s11 = ssub.s32 1, %s9
  %s12 = scalar_select 0, %s11, %s9
  loop: start=0, step=1, limit=4
  $region2: #{amm_basic_block.2} parent=0 // loop_pre_header
    _
  $region3: #{amm_basic_block.2} parent=0 // loop_header
    %s14 = sphi 0, %s18
    %p15 = scmp.ge.s32.totalorder %s14, 4
    %s24 = sphi 0, %s26
    %s27 = sphi 0, %s24
    %s28 = sphi 0, %s27
    %s44 = sphi 0, %s28
    %s48 = sphi 0, %s48
    %s50 = sphi 0, %s48
    %s51 = sphi 0, %s50
    %s65 = sphi 0, %s51
    %s69 = sphi 0, %s69
    %s71 = sphi 0, %s69
    %s72 = sphi 0, %s71
    %s86 = sphi 0, %s72
    %s90 = sphi 0, %s90
    %s92 = sphi 0, %s90
    %s93 = sphi 0, %s92
    %s107 = sphi 0, %s93
    %s111 = sphi 0, %s111
    %s113 = sphi 0, %s111
    %s114 = sphi 0, %s113
    %s128 = sphi 0, %s114
    %s132 = sphi 0, %s132
    %s134 = sphi 0, %s132
    %s135 = sphi 0, %s134
    %s149 = sphi 0, %s135
    %s153 = sphi 0, %s153
    %s155 = sphi 0, %s153
    %s156 = sphi 0, %s155
    %s170 = sphi 0, %s156
    %s174 = sphi 0, %s174
    %s176 = sphi 0, %s174
    %s177 = sphi 0, %s176
    %s191 = sphi 0, %s177
    %s197 = sphi 0, %s199
    %s200 = sphi 0, %s197
    %s201 = sphi 0, %s200
    %s217 = sphi 0, %s201
  $region4: #{amm_basic_block.2} parent=0 // loop_header_branch
    %17 = sbr.rel (%p15) target = $region8
  $region5: #{amm_basic_block.2} parent=0 // loop_body
    %s19 = ssub.s32 %s14, 1
    %s20 = ssub.s32 %s14, 2
    %s21 = sadd.s32 %s14, 1
    %s22 = ssub.s32 %s14, %s21
    %p23 = scmp.eq.s32.totalorder %s22, 0
    %s25 = sadd.s32 %s24, 1
    %s26 = scalar_select %p23, %s24, %s25
    %p29 = pneg %p23
    %p30 = scmp.eq.s32.totalorder %s14, 1
    %p31 = por %p29, %p30
    %p32 = scmp.ne.s32.totalorder %s24, %s27
    %p33 = scmp.eq.s32.totalorder %s14, 0
    %p34 = por %p32, %p33
    %p35 = scmp.ne.s32.totalorder %s24, %s27
    %p36 = scmp.eq.s32.totalorder %s19, 1
    %p37 = por %p35, %p36
    %p38 = scmp.ne.s32.totalorder %s27, %s28
    %p39 = scmp.eq.s32.totalorder %s19, 0
    %p40 = por %p38, %p39
    %p41 = scmp.ne.s32.totalorder %s27, %s28
    %p42 = scmp.eq.s32.totalorder %s20, 1
    %p43 = por %p41, %p42
    %p45 = scmp.ne.s32.totalorder %s28, %s44
    %p46 = scmp.eq.s32.totalorder %s20, 0
    %p47 = por %p45, %p46
    %s49 = sadd.s32 %s48, 1
    %p52 = scmp.eq.s32.totalorder %s14, 1
    %p53 = scmp.ne.s32.totalorder %s48, %s50
    %p54 = scmp.eq.s32.totalorder %s14, 0
    %p55 = por %p53, %p54
    %p56 = scmp.ne.s32.totalorder %s48, %s50
    %p57 = scmp.eq.s32.totalorder %s19, 1
    %p58 = por %p56, %p57
    %p59 = scmp.ne.s32.totalorder %s50, %s51
    %p60 = scmp.eq.s32.totalorder %s19, 0
    %p61 = por %p59, %p60
    %p62 = scmp.ne.s32.totalorder %s50, %s51
    %p63 = scmp.eq.s32.totalorder %s20, 1
    %p64 = por %p62, %p63
    %p66 = scmp.ne.s32.totalorder %s51, %s65
    %p67 = scmp.eq.s32.totalorder %s20, 0
    %p68 = por %p66, %p67
    %s70 = sadd.s32 %s69, 1
    %p73 = scmp.eq.s32.totalorder %s14, 1
    %p74 = scmp.ne.s32.totalorder %s69, %s71
    %p75 = scmp.eq.s32.totalorder %s14, 0
    %p76 = por %p74, %p75
    %p77 = scmp.ne.s32.totalorder %s69, %s71
    %p78 = scmp.eq.s32.totalorder %s19, 1
    %p79 = por %p77, %p78
    %p80 = scmp.ne.s32.totalorder %s71, %s72
    %p81 = scmp.eq.s32.totalorder %s19, 0
    %p82 = por %p80, %p81
    %p83 = scmp.ne.s32.totalorder %s71, %s72
    %p84 = scmp.eq.s32.totalorder %s20, 1
    %p85 = por %p83, %p84
    %p87 = scmp.ne.s32.totalorder %s72, %s86
    %p88 = scmp.eq.s32.totalorder %s20, 0
    %p89 = por %p87, %p88
    %s91 = sadd.s32 %s90, 1
    %p94 = scmp.eq.s32.totalorder %s14, 1
    %p95 = scmp.ne.s32.totalorder %s90, %s92
    %p96 = scmp.eq.s32.totalorder %s14, 0
    %p97 = por %p95, %p96
    %p98 = scmp.ne.s32.totalorder %s90, %s92
    %p99 = scmp.eq.s32.totalorder %s19, 1
    %p100 = por %p98, %p99
    %p101 = scmp.ne.s32.totalorder %s92, %s93
    %p102 = scmp.eq.s32.totalorder %s19, 0
    %p103 = por %p101, %p102
    %p104 = scmp.ne.s32.totalorder %s92, %s93
    %p105 = scmp.eq.s32.totalorder %s20, 1
    %p106 = por %p104, %p105
    %p108 = scmp.ne.s32.totalorder %s93, %s107
    %p109 = scmp.eq.s32.totalorder %s20, 0
    %p110 = por %p108, %p109
    %s112 = sadd.s32 %s111, 1
    %p115 = scmp.eq.s32.totalorder %s14, 1
    %p116 = scmp.ne.s32.totalorder %s111, %s113
    %p117 = scmp.eq.s32.totalorder %s14, 0
    %p118 = por %p116, %p117
    %p119 = scmp.ne.s32.totalorder %s111, %s113
    %p120 = scmp.eq.s32.totalorder %s19, 1
    %p121 = por %p119, %p120
    %p122 = scmp.ne.s32.totalorder %s113, %s114
    %p123 = scmp.eq.s32.totalorder %s19, 0
    %p124 = por %p122, %p123
    %p125 = scmp.ne.s32.totalorder %s113, %s114
    %p126 = scmp.eq.s32.totalorder %s20, 1
    %p127 = por %p125, %p126
    %p129 = scmp.ne.s32.totalorder %s114, %s128
    %p130 = scmp.eq.s32.totalorder %s20, 0
    %p131 = por %p129, %p130
    %s133 = sadd.s32 %s132, 1
    %p136 = scmp.eq.s32.totalorder %s14, 1
    %p137 = scmp.ne.s32.totalorder %s132, %s134
    %p138 = scmp.eq.s32.totalorder %s14, 0
    %p139 = por %p137, %p138
    %p140 = scmp.ne.s32.totalorder %s132, %s134
    %p141 = scmp.eq.s32.totalorder %s19, 1
    %p142 = por %p140, %p141
    %p143 = scmp.ne.s32.totalorder %s134, %s135
    %p144 = scmp.eq.s32.totalorder %s19, 0
    %p145 = por %p143, %p144
    %p146 = scmp.ne.s32.totalorder %s134, %s135
    %p147 = scmp.eq.s32.totalorder %s20, 1
    %p148 = por %p146, %p147
    %p150 = scmp.ne.s32.totalorder %s135, %s149
    %p151 = scmp.eq.s32.totalorder %s20, 0
    %p152 = por %p150, %p151
    %s154 = sadd.s32 %s153, 1
    %p157 = scmp.eq.s32.totalorder %s14, 1
    %p158 = scmp.ne.s32.totalorder %s153, %s155
    %p159 = scmp.eq.s32.totalorder %s14, 0
    %p160 = por %p158, %p159
    %p161 = scmp.ne.s32.totalorder %s153, %s155
    %p162 = scmp.eq.s32.totalorder %s19, 1
    %p163 = por %p161, %p162
    %p164 = scmp.ne.s32.totalorder %s155, %s156
    %p165 = scmp.eq.s32.totalorder %s19, 0
    %p166 = por %p164, %p165
    %p167 = scmp.ne.s32.totalorder %s155, %s156
    %p168 = scmp.eq.s32.totalorder %s20, 1
    %p169 = por %p167, %p168
    %p171 = scmp.ne.s32.totalorder %s156, %s170
    %p172 = scmp.eq.s32.totalorder %s20, 0
    %p173 = por %p171, %p172
    %s175 = sadd.s32 %s174, 1
    %p178 = scmp.eq.s32.totalorder %s14, 1
    %p179 = scmp.ne.s32.totalorder %s174, %s176
    %p180 = scmp.eq.s32.totalorder %s14, 0
    %p181 = por %p179, %p180
    %p182 = scmp.ne.s32.totalorder %s174, %s176
    %p183 = scmp.eq.s32.totalorder %s19, 1
    %p184 = por %p182, %p183
    %p185 = scmp.ne.s32.totalorder %s176, %s177
    %p186 = scmp.eq.s32.totalorder %s19, 0
    %p187 = por %p185, %p186
    %p188 = scmp.ne.s32.totalorder %s176, %s177
    %p189 = scmp.eq.s32.totalorder %s20, 1
    %p190 = por %p188, %p189
    %p192 = scmp.ne.s32.totalorder %s177, %s191
    %p193 = scmp.eq.s32.totalorder %s20, 0
    %p194 = por %p192, %p193
    %s195 = ssub.s32 %s14, %s21
    %p196 = scmp.eq.s32.totalorder %s195, 0
    %s198 = sadd.s32 %s197, 1
    %s199 = scalar_select %p196, %s197, %s198
    %p202 = pneg %p196
    %p203 = scmp.eq.s32.totalorder %s14, 1
    %p204 = por %p202, %p203
    %p205 = scmp.ne.s32.totalorder %s197, %s200
    %p206 = scmp.eq.s32.totalorder %s14, 0
    %p207 = por %p205, %p206
    %p208 = scmp.ne.s32.totalorder %s197, %s200
    %p209 = scmp.eq.s32.totalorder %s19, 1
    %p210 = por %p208, %p209
    %p211 = scmp.ne.s32.totalorder %s200, %s201
    %p212 = scmp.eq.s32.totalorder %s19, 0
    %p213 = por %p211, %p212
    %p214 = scmp.ne.s32.totalorder %s200, %s201
    %p215 = scmp.eq.s32.totalorder %s20, 1
    %p216 = por %p214, %p215
    %p218 = scmp.ne.s32.totalorder %s201, %s217
    %p219 = scmp.eq.s32.totalorder %s20, 0
    %p220 = por %p218, %p219
    %p221 = scmp.le.s32.totalorder 1, %s14
    %p222 = scmp.lt.s32.totalorder %s14, 3
    %p223 = pnand %p221, %p222
    %p224 = pneg %p223
    // Predicated region
    $region9: #{amm_basic_block.2} parent=5 // pred_check
      _
    $region10: #{amm_basic_block.2} parent=5 // pred_check_branch
      %226 = sbr.rel (%p223) target = $region12
    $region11: #{amm_basic_block.2} parent=5 // pred_region
      %s227 = ssub.s32 %s14, 1
      // Predicated region
      $region13: #{amm_basic_block.2} parent=11 // pred_check
        %p228 = pneg %p61
      $region14: #{amm_basic_block.2} parent=11 // pred_check_branch
        %230 = sbr.rel (%p228) target = $region16
      $region15: #{amm_basic_block.2} parent=11 // pred_region
        _
      $region16: #{amm_basic_block.2} parent=11 // pred_fallthru
        _
      // Predicated region
      $region17: #{amm_basic_block.2} parent=11 // pred_check
        %p231 = pneg %p82
      $region18: #{amm_basic_block.2} parent=11 // pred_check_branch
        %233 = sbr.rel (%p231) target = $region20
      $region19: #{amm_basic_block.2} parent=11 // pred_region
        _
      $region20: #{amm_basic_block.2} parent=11 // pred_fallthru
        _
      // Predicated region
      $region21: #{amm_basic_block.2} parent=11 // pred_check
        %p234 = pneg %p103
      $region22: #{amm_basic_block.2} parent=11 // pred_check_branch
        %236 = sbr.rel (%p234) target = $region24
      $region23: #{amm_basic_block.2} parent=11 // pred_region
        _
      $region24: #{amm_basic_block.2} parent=11 // pred_fallthru
        _
      // Predicated region
      $region25: #{amm_basic_block.2} parent=11 // pred_check
        %p237 = pneg %p124
      $region26: #{amm_basic_block.2} parent=11 // pred_check_branch
        %239 = sbr.rel (%p237) target = $region28
      $region27: #{amm_basic_block.2} parent=11 // pred_region
        _
      $region28: #{amm_basic_block.2} parent=11 // pred_fallthru
        _
      // Predicated region
      $region29: #{amm_basic_block.2} parent=11 // pred_check
        %p240 = pneg %p145
      $region30: #{amm_basic_block.2} parent=11 // pred_check_branch
        %242 = sbr.rel (%p240) target = $region32
      $region31: #{amm_basic_block.2} parent=11 // pred_region
        _
      $region32: #{amm_basic_block.2} parent=11 // pred_fallthru
        _
      // Predicated region
      $region33: #{amm_basic_block.2} parent=11 // pred_check
        %p243 = pneg %p166
      $region34: #{amm_basic_block.2} parent=11 // pred_check_branch
        %245 = sbr.rel (%p243) target = $region36
      $region35: #{amm_basic_block.2} parent=11 // pred_region
        _
      $region36: #{amm_basic_block.2} parent=11 // pred_fallthru
        _
      // Predicated region
      $region37: #{amm_basic_block.2} parent=11 // pred_check
        %p246 = pneg %p187
      $region38: #{amm_basic_block.2} parent=11 // pred_check_branch
        %248 = sbr.rel (%p246) target = $region40
      $region39: #{amm_basic_block.2} parent=11 // pred_region
        _
      $region40: #{amm_basic_block.2} parent=11 // pred_fallthru
        _
    $region12: #{amm_basic_block.2} parent=5 // pred_fallthru
      _
    %p249 = scmp.lt.s32.totalorder %s14, 2
    // Predicated region
    $region41: #{amm_basic_block.2} parent=5 // pred_check
      %p250 = pneg %p249
    $region42: #{amm_basic_block.2} parent=5 // pred_check_branch
      %252 = sbr.rel (%p250) target = $region44
    $region43: #{amm_basic_block.2} parent=5 // pred_region
      // Predicated region
      $region45: #{amm_basic_block.2} parent=43 // pred_check
        %p253 = pneg %p34
      $region46: #{amm_basic_block.2} parent=43 // pred_check_branch
        %255 = sbr.rel (%p253) target = $region48
      $region47: #{amm_basic_block.2} parent=43 // pred_region
        %s256 = smul.u32 8, %s14
        %p257 = scmp.lt.s32.totalorder %s256, 15
        %s258 = scalar_select %p257, %s256, 15
        %s259 = smul.addr %s258, 4
        %s260 = scalar_lea.vmem %s0, %s259
        %s261 = smul.u32 8, %s14
      $region48: #{amm_basic_block.2} parent=43 // pred_fallthru
        _
    $region44: #{amm_basic_block.2} parent=5 // pred_fallthru
      _
    %p262 = scmp.le.s32.totalorder 1, %s14
    %p263 = scmp.lt.s32.totalorder %s14, 3
    %p264 = pnand %p262, %p263
    %p265 = pneg %p264
    // Predicated region
    $region49: #{amm_basic_block.2} parent=5 // pred_check
      _
    $region50: #{amm_basic_block.2} parent=5 // pred_check_branch
      %267 = sbr.rel (%p264) target = $region52
    $region51: #{amm_basic_block.2} parent=5 // pred_region
      %s268 = ssub.s32 %s14, 1
      %s269 = smul.u32 8, %s19
      %p270 = scmp.lt.s32.totalorder %s269, 15
      %s271 = scalar_select %p270, %s269, 15
      %s272 = smul.addr %s271, 4
      %s273 = scalar_lea.vmem %s0, %s272
      %p274 = pneg %p40
      %p275 = pneg %p37
      %p276 = pneg %p61
      %p277 = pneg %p58
      %p278 = pneg %p82
      %p279 = pneg %p79
      %p280 = pneg %p103
      %p281 = pneg %p100
      %p282 = pneg %p124
      %p283 = pneg %p121
      %p284 = pneg %p145
      %p285 = pneg %p142
      %p286 = pneg %p166
      %p287 = pneg %p163
      %p288 = pneg %p187
      %p289 = pneg %p184
      %p290 = pneg %p213
      %p291 = pneg %p210
      %s292 = smul.u32 8, %s19
      %p293 = scmp.lt.s32.totalorder %s292, 15
      %s294 = scalar_select %p293, %s292, 15
      %s295 = smul.addr %s294, 8
      %s296 = scalar_lea.vmem %s8, %s295
      %s297 = smul.u32 8, %s19
      %p298 = scmp.lt.s32.totalorder %s297, 15
      %s299 = scalar_select %p298, %s297, 15
      %s300 = smul.addr %s299, 4
      %s301 = scalar_lea.vmem %s0, %s300
      %s302 = smul.u32 8, %s19
      %s303 = smul.u32 8, %s19
      %p304 = scmp.lt.s32.totalorder %s303, 15
      %s305 = scalar_select %p304, %s303, 15
      %s306 = smul.addr %s305, 8
      %s307 = scalar_lea.vmem %s8, %s306
      %s308 = smul.u32 8, %s19
      %v310 = vld [vmem:[%s301] sm:$0xf]
      %v311 = vld [vmem:[%s301 + $0x4] sm:$0xf]
      %v312 = vld [vmem:[%s301 + $0x8] sm:$0xf]
      %v313 = vld [vmem:[%s301 + $0xc] sm:$0xf]
      %v314 = vld [vmem:[%s301 + $0x10] sm:$0xf]
      %v315 = vld [vmem:[%s301 + $0x14] sm:$0xf]
      %v316 = vld [vmem:[%s301 + $0x18] sm:$0xf]
      %v317 = vld [vmem:[%s301 + $0x1c] sm:$0xf]
      %v318 = vld [vmem:[%s1] sm:$0xf]
      %v319 = vld [vmem:[%s1 + $0x4] sm:$0xf]
      %v320 = vld [vmem:[%s1 + $0x8] sm:$0xf]
      %v321 = vld [vmem:[%s1 + $0xc] sm:$0xf]
      %v322 = vld [vmem:[%s1 + $0x10] sm:$0x3]
      %v323 = vmul.bf16 %v310, %v310
      %v324 = vmul.bf16 %v311, %v311
      %v325 = vmul.bf16 %v312, %v312
      %v326 = vmul.bf16 %v313, %v313
      %v327 = vmul.bf16 %v314, %v314
      %v328 = vmul.bf16 %v315, %v315
      %v329 = vmul.bf16 %v316, %v316
      %v330 = vmul.bf16 %v317, %v317
      %v331 = vld [vmem:[%s2] sm:$0xf]
      %v332 = vld [vmem:[%s2 + $0x4] sm:$0xf]
      %v333 = vld [vmem:[%s2 + $0x8] sm:$0xf]
      %v334 = vld [vmem:[%s2 + $0xc] sm:$0xf]
      %v335 = vld [vmem:[%s2 + $0x10] sm:$0x3]
      %v344 = vunpack.c.l.b16 %v323
      %v345 = vunpack.c.l.b16 %v324
      %v346 = vunpack.c.l.b16 %v325
      %v347 = vunpack.c.l.b16 %v326
      %v348 = vunpack.c.l.b16 %v327
      %v349 = vunpack.c.l.b16 %v328
      %v350 = vunpack.c.l.b16 %v329
      %v351 = vunpack.c.l.b16 %v330
      %v352 = vpack.c.b16 %v345, %v344
      %v353 = vpack.c.b16 %v347, %v346
      %v354 = vpack.c.b16 %v349, %v348
      %v355 = vpack.c.b16 %v351, %v350
      %v361 = vunpack.c.l.b16 %v331
      %v362 = vunpack.c.l.b16 %v332
      %v363 = vunpack.c.l.b16 %v333
      %v364 = vunpack.c.l.b16 %v334
      %v365 = vunpack.c.l.b16 %v335
      %v366 = vpack.c.b16 %v362, %v361
      %v367 = vpack.c.b16 %v364, %v363
      %v368 = vpack.c.b16 %v365, %v365
      %vm371 = vcmask 293888
      %v373 = vsel %vm371, %v352, 0
      %v376 = vsel %vm371, %v353, 0
      %v379 = vsel %vm371, %v354, 0
      %v382 = vsel %vm371, %v355, 0
      %vm384 = vcmask 1041408
      %v386 = vsel %vm384, %v368, 0
      %388 = vmatprep.subr.bf16.mxu0 0
      %389 = vmatpush1.bf16.msra.mxu0 %v366
      %390 = vmatprep.subr.bf16.mxu0 0
      %391 = vmatpush1.bf16.msra.mxu0 %v367
      %392 = vmatprep.subr.bf16.mxu0 0
      %393 = vmatpush1.bf16.msra.mxu0 %v386
      %394 = vmatprep.subr.bf16.mxu0 0
      %395 = vmatpush1.bf16.msra.mxu0 0
      %396 = vmatprep.subr.bf16.mxu0 0
      %397 = vmatpush1.bf16.msra.mxu0 0
      %398 = vmatprep.subr.bf16.mxu0 0
      %399 = vmatpush1.bf16.msra.mxu0 0
      %400 = vmatprep.subr.bf16.mxu0 0
      %401 = vmatpush1.bf16.msra.mxu0 0
      %402 = vmatprep.subr.bf16.mxu0 0
      %403 = vmatpush1.bf16.msra.mxu0 0
      %404 = vmatprep.subr.bf16.mxu0 0
      %405 = vmatpush1.bf16.msra.mxu0 0
      %406 = vmatprep.subr.bf16.mxu0 0
      %407 = vmatpush1.bf16.msra.mxu0 0
      %408 = vmatprep.subr.bf16.mxu0 0
      %409 = vmatpush1.bf16.msra.mxu0 0
      %410 = vmatprep.subr.bf16.mxu0 0
      %411 = vmatpush1.bf16.msra.mxu0 0
      %412 = vmatprep.subr.bf16.mxu0 0
      %413 = vmatpush1.bf16.msra.mxu0 0
      %414 = vmatprep.subr.bf16.mxu0 0
      %415 = vmatpush1.bf16.msra.mxu0 0
      %416 = vmatprep.subr.bf16.mxu0 0
      %417 = vmatpush1.bf16.msra.mxu0 0
      %418 = vmatprep.subr.bf16.mxu0 0
      %419 = vmatpush1.bf16.msra.mxu0 0
      %420 = vmatprep.mubr.bf16.mxu0 0
      %421 = vmatmul.mubr.bf16.gmra.mrb[0].mxu0 %v373
      %v422 = vpop.f32.mrb[0].mxu0
      %v423 = vadd.f32 0.0, %v422
      %v424 = vpop.f32.mrb[0].mxu0
      %v425 = vpop.f32.mrb[0].mxu0
      %v426 = vadd.f32 0.0, %v425
      %v427 = vpop.f32.mrb[0].mxu0
      %428 = vmatprep.mubr.bf16.mxu0 0
      %429 = vmatmul.mubr.bf16.gmra.mrb[0].mxu0 %v376
      %v430 = vpop.f32.mrb[0].mxu0
      %v431 = vadd.f32 0.0, %v430
      %v432 = vpop.f32.mrb[0].mxu0
      %v433 = vpop.f32.mrb[0].mxu0
      %v434 = vadd.f32 0.0, %v433
      %v435 = vpop.f32.mrb[0].mxu0
      %436 = vmatprep.mubr.bf16.mxu0 0
      %437 = vmatmul.mubr.bf16.gmra.mrb[0].mxu0 %v379
      %v438 = vpop.f32.mrb[0].mxu0
      %v439 = vadd.f32 0.0, %v438
      %v440 = vpop.f32.mrb[0].mxu0
      %v441 = vpop.f32.mrb[0].mxu0
      %v442 = vadd.f32 0.0, %v441
      %v443 = vpop.f32.mrb[0].mxu0
      %444 = vmatprep.mubr.bf16.mxu0 0
      %445 = vmatmul.mubr.bf16.gmra.mrb[0].mxu0 %v382
      %v446 = vpop.f32.mrb[0].mxu0
      %v447 = vadd.f32 0.0, %v446
      %v448 = vpop.f32.mrb[0].mxu0
      %v449 = vpop.f32.mrb[0].mxu0
      %v450 = vadd.f32 0.0, %v449
      %v451 = vpop.f32.mrb[0].mxu0
      %452 = vdwg.mxu0
      %v453 = vld [vmem:[%s5] sm:$0xf]
      %vm454 = vcmask 31744
      %v456 = vsel %vm454, %v423, 0
      %v459 = vsel %vm454, %v426, 0
      %v462 = vsel %vm454, %v431, 0
      %v465 = vsel %vm454, %v434, 0
      %v468 = vsel %vm454, %v439, 0
      %v471 = vsel %vm454, %v442, 0
      %v474 = vsel %vm454, %v447, 0
      %v477 = vsel %vm454, %v450, 0
      %vm479 = vcmask 1043456
      %v481 = vsel %vm479, %v453, 0
      %483 = vmatprep.subr.mxu0 0.0
      %484 = vmatpush1.msra.mxu0 %v481
      %485 = vmatprep.subr.mxu0 0.0
      %486 = vmatpush1.msra.mxu0 0.0
      %487 = vmatprep.subr.mxu0 0.0
      %488 = vmatpush1.msra.mxu0 0.0
      %489 = vmatprep.subr.mxu0 0.0
      %490 = vmatpush1.msra.mxu0 0.0
      %491 = vmatprep.subr.mxu0 0.0
      %492 = vmatpush1.msra.mxu0 0.0
      %493 = vmatprep.subr.mxu0 0.0
      %494 = vmatpush1.msra.mxu0 0.0
      %495 = vmatprep.subr.mxu0 0.0
      %496 = vmatpush1.msra.mxu0 0.0
      %497 = vmatprep.subr.mxu0 0.0
      %498 = vmatpush1.msra.mxu0 0.0
      %499 = vmatprep.subr.mxu0 0.0
      %500 = vmatpush1.msra.mxu0 0.0
      %501 = vmatprep.subr.mxu0 0.0
      %502 = vmatpush1.msra.mxu0 0.0
      %503 = vmatprep.subr.mxu0 0.0
      %504 = vmatpush1.msra.mxu0 0.0
      %505 = vmatprep.subr.mxu0 0.0
      %506 = vmatpush1.msra.mxu0 0.0
      %507 = vmatprep.subr.mxu0 0.0
      %508 = vmatpush1.msra.mxu0 0.0
      %509 = vmatprep.subr.mxu0 0.0
      %510 = vmatpush1.msra.mxu0 0.0
      %511 = vmatprep.subr.mxu0 0.0
      %512 = vmatpush1.msra.mxu0 0.0
      %513 = vmatprep.subr.mxu0 0.0
      %514 = vmatpush1.msra.mxu0 0.0
      %515 = vmatprep.subr.mxu0 0.0
      %516 = vmatpush1.msra.mxu0 0.0
      %517 = vmatprep.subr.mxu0 0.0
      %518 = vmatpush1.msra.mxu0 0.0
      %519 = vmatprep.subr.mxu0 0.0
      %520 = vmatpush1.msra.mxu0 0.0
      %521 = vmatprep.subr.mxu0 0.0
      %522 = vmatpush1.msra.mxu0 0.0
      %523 = vmatprep.subr.mxu0 0.0
      %524 = vmatpush1.msra.mxu0 0.0
      %525 = vmatprep.subr.mxu0 0.0
      %526 = vmatpush1.msra.mxu0 0.0
      %527 = vmatprep.subr.mxu0 0.0
      %528 = vmatpush1.msra.mxu0 0.0
      %529 = vmatprep.subr.mxu0 0.0
      %530 = vmatpush1.msra.mxu0 0.0
      %531 = vmatprep.subr.mxu0 0.0
      %532 = vmatpush1.msra.mxu0 0.0
      %533 = vmatprep.subr.mxu0 0.0
      %534 = vmatpush1.msra.mxu0 0.0
      %535 = vmatprep.subr.mxu0 0.0
      %536 = vmatpush1.msra.mxu0 0.0
      %537 = vmatprep.subr.mxu0 0.0
      %538 = vmatpush1.msra.mxu0 0.0
      %539 = vmatprep.subr.mxu0 0.0
      %540 = vmatpush1.msra.mxu0 0.0
      %541 = vmatprep.subr.mxu0 0.0
      %542 = vmatpush1.msra.mxu0 0.0
      %543 = vmatprep.subr.mxu0 0.0
      %544 = vmatpush1.msra.mxu0 0.0
      %545 = vmatprep.subr.mxu0 0.0
      %546 = vmatpush1.msra.mxu0 0.0
      %547 = vmatprep.mubr.f32.mxu0 0.0
      %548 = vmatmul.mubr.f32.gmra.mrb[0].mxu0 %v456
      %v549 = vpop.f32.mrb[0].mxu0
      %v550 = vadd.f32 0.0, %v549
      %v551 = vpop.f32.mrb[0].mxu0
      %552 = vmatprep.mubr.f32.mxu0 0.0
      %553 = vmatmul.mubr.f32.gmra.mrb[0].mxu0 %v459
      %v554 = vpop.f32.mrb[0].mxu0
      %v555 = vadd.f32 0.0, %v554
      %v556 = vpop.f32.mrb[0].mxu0
      %557 = vmatprep.mubr.f32.mxu0 0.0
      %558 = vmatmul.mubr.f32.gmra.mrb[0].mxu0 %v462
      %v559 = vpop.f32.mrb[0].mxu0
      %v560 = vadd.f32 0.0, %v559
      %v561 = vpop.f32.mrb[0].mxu0
      %562 = vmatprep.mubr.f32.mxu0 0.0
      %563 = vmatmul.mubr.f32.gmra.mrb[0].mxu0 %v465
      %v564 = vpop.f32.mrb[0].mxu0
      %v565 = vadd.f32 0.0, %v564
      %v566 = vpop.f32.mrb[0].mxu0
      %567 = vmatprep.mubr.f32.mxu0 0.0
      %568 = vmatmul.mubr.f32.gmra.mrb[0].mxu0 %v468
      %v569 = vpop.f32.mrb[0].mxu0
      %v570 = vadd.f32 0.0, %v569
      %v571 = vpop.f32.mrb[0].mxu0
      %572 = vmatprep.mubr.f32.mxu0 0.0
      %573 = vmatmul.mubr.f32.gmra.mrb[0].mxu0 %v471
      %v574 = vpop.f32.mrb[0].mxu0
      %v575 = vadd.f32 0.0, %v574
      %v576 = vpop.f32.mrb[0].mxu0
      %577 = vmatprep.mubr.f32.mxu0 0.0
      %578 = vmatmul.mubr.f32.gmra.mrb[0].mxu0 %v474
      %v579 = vpop.f32.mrb[0].mxu0
      %v580 = vadd.f32 0.0, %v579
      %v581 = vpop.f32.mrb[0].mxu0
      %582 = vmatprep.mubr.f32.mxu0 0.0
      %583 = vmatmul.mubr.f32.gmra.mrb[0].mxu0 %v477
      %v584 = vpop.f32.mrb[0].mxu0
      %v585 = vadd.f32 0.0, %v584
      %v586 = vpop.f32.mrb[0].mxu0
      %587 = vdwg.mxu0
      %v596 = vunpack.c.l.b16 %v310
      %v597 = vunpack.c.l.b16 %v311
      %v598 = vunpack.c.l.b16 %v312
      %v599 = vunpack.c.l.b16 %v313
      %v600 = vunpack.c.l.b16 %v314
      %v601 = vunpack.c.l.b16 %v315
      %v602 = vunpack.c.l.b16 %v316
      %v603 = vunpack.c.l.b16 %v317
      %v604 = vpack.c.b16 %v597, %v596
      %v605 = vpack.c.b16 %v599, %v598
      %v606 = vpack.c.b16 %v601, %v600
      %v607 = vpack.c.b16 %v603, %v602
      %v613 = vunpack.c.l.b16 %v318
      %v614 = vunpack.c.l.b16 %v319
      %v615 = vunpack.c.l.b16 %v320
      %v616 = vunpack.c.l.b16 %v321
      %v617 = vunpack.c.l.b16 %v322
      %v618 = vpack.c.b16 %v614, %v613
      %v619 = vpack.c.b16 %v616, %v615
      %v620 = vpack.c.b16 %v617, %v617
      %v624 = vsel %vm371, %v604, 0
      %v627 = vsel %vm371, %v605, 0
      %v630 = vsel %vm371, %v606, 0
      %v633 = vsel %vm371, %v607, 0
      %v636 = vsel %vm384, %v620, 0
      %638 = vmatprep.subr.bf16.mxu0 0
      %639 = vmatpush1.bf16.msra.mxu0 %v618
      %640 = vmatprep.subr.bf16.mxu0 0
      %641 = vmatpush1.bf16.msra.mxu0 %v619
      %642 = vmatprep.subr.bf16.mxu0 0
      %643 = vmatpush1.bf16.msra.mxu0 %v636
      %644 = vmatprep.subr.bf16.mxu0 0
      %645 = vmatpush1.bf16.msra.mxu0 0
      %646 = vmatprep.subr.bf16.mxu0 0
      %647 = vmatpush1.bf16.msra.mxu0 0
      %648 = vmatprep.subr.bf16.mxu0 0
      %649 = vmatpush1.bf16.msra.mxu0 0
      %650 = vmatprep.subr.bf16.mxu0 0
      %651 = vmatpush1.bf16.msra.mxu0 0
      %652 = vmatprep.subr.bf16.mxu0 0
      %653 = vmatpush1.bf16.msra.mxu0 0
      %654 = vmatprep.subr.bf16.mxu0 0
      %655 = vmatpush1.bf16.msra.mxu0 0
      %656 = vmatprep.subr.bf16.mxu0 0
      %657 = vmatpush1.bf16.msra.mxu0 0
      %658 = vmatprep.subr.bf16.mxu0 0
      %659 = vmatpush1.bf16.msra.mxu0 0
      %660 = vmatprep.subr.bf16.mxu0 0
      %661 = vmatpush1.bf16.msra.mxu0 0
      %662 = vmatprep.subr.bf16.mxu0 0
      %663 = vmatpush1.bf16.msra.mxu0 0
      %664 = vmatprep.subr.bf16.mxu0 0
      %665 = vmatpush1.bf16.msra.mxu0 0
      %666 = vmatprep.subr.bf16.mxu0 0
      %667 = vmatpush1.bf16.msra.mxu0 0
      %668 = vmatprep.subr.bf16.mxu0 0
      %669 = vmatpush1.bf16.msra.mxu0 0
      %670 = vmatprep.mubr.bf16.mxu0 0
      %671 = vmatmul.mubr.bf16.gmra.mrb[0].mxu0 %v624
      %v672 = vpop.f32.mrb[0].mxu0
      %v673 = vadd.f32 %v550, %v672
      %v674 = vpop.f32.mrb[0].mxu0
      %v675 = vpop.f32.mrb[0].mxu0
      %v676 = vadd.f32 %v555, %v675
      %v677 = vpop.f32.mrb[0].mxu0
      %678 = vmatprep.mubr.bf16.mxu0 0
      %679 = vmatmul.mubr.bf16.gmra.mrb[0].mxu0 %v627
      %v680 = vpop.f32.mrb[0].mxu0
      %v681 = vadd.f32 %v560, %v680
      %v682 = vpop.f32.mrb[0].mxu0
      %v683 = vpop.f32.mrb[0].mxu0
      %v684 = vadd.f32 %v565, %v683
      %v685 = vpop.f32.mrb[0].mxu0
      %686 = vmatprep.mubr.bf16.mxu0 0
      %687 = vmatmul.mubr.bf16.gmra.mrb[0].mxu0 %v630
      %v688 = vpop.f32.mrb[0].mxu0
      %v689 = vadd.f32 %v570, %v688
      %v690 = vpop.f32.mrb[0].mxu0
      %v691 = vpop.f32.mrb[0].mxu0
      %v692 = vadd.f32 %v575, %v691
      %v693 = vpop.f32.mrb[0].mxu0
      %694 = vmatprep.mubr.bf16.mxu0 0
      %695 = vmatmul.mubr.bf16.gmra.mrb[0].mxu0 %v633
      %v696 = vpop.f32.mrb[0].mxu0
      %v697 = vadd.f32 %v580, %v696
      %v698 = vpop.f32.mrb[0].mxu0
      %v699 = vpop.f32.mrb[0].mxu0
      %v700 = vadd.f32 %v585, %v699
      %v701 = vpop.f32.mrb[0].mxu0
      %702 = vdwg.mxu0
      %v703 = vld [vmem:[%s3] sm:$0x1]
      %v705 = vlaneseq
      %v706 = vshrl.u32 %v705, 7
      %v707 = vsub.s32 0, %v706
      %v708 = vrot.slane %v703, %v707
      %v710 = vadd.f32 %v673, %v708
      %v711 = vadd.f32 %v676, %v708
      %v712 = vadd.f32 %v681, %v708
      %v713 = vadd.f32 %v684, %v708
      %v714 = vadd.f32 %v689, %v708
      %v715 = vadd.f32 %v692, %v708
      %v716 = vadd.f32 %v697, %v708
      %v717 = vadd.f32 %v700, %v708
      %v718 = vmul.f32 %v710, 1.442695
      %v719 = vpow.pop %v718
      %v720 = vmul.f32 %v711, 1.442695
      %v721 = vpow.pop %v720
      %v722 = vmul.f32 %v712, 1.442695
      %v723 = vpow.pop %v722
      %v724 = vmul.f32 %v713, 1.442695
      %v725 = vpow.pop %v724
      %v726 = vmul.f32 %v714, 1.442695
      %v727 = vpow.pop %v726
      %v728 = vmul.f32 %v715, 1.442695
      %v729 = vpow.pop %v728
      %v730 = vmul.f32 %v716, 1.442695
      %v731 = vpow.pop %v730
      %v732 = vmul.f32 %v717, 1.442695
      %v733 = vpow.pop %v732
      %v734 = vld [vmem:[%s4] sm:$0xff]
      %v735 = vld [vmem:[%s4 + $0x8] sm:$0xff]
      %v736 = vld [vmem:[%s4 + $0x10] sm:$0xff]
      %v737 = vld [vmem:[%s4 + $0x18] sm:$0xff]
      %v738 = vld [vmem:[%s4 + $0x20] sm:$0xff]
      %v739 = vld [vmem:[%s4 + $0x28] sm:$0xff]
      %v740 = vld [vmem:[%s4 + $0x30] sm:$0xff]
      %v741 = vld [vmem:[%s4 + $0x38] sm:$0xff]
      %vm742 = vcmask 523264
      %v744 = vsel %vm742, %v719, 0
      %v747 = vsel %vm742, %v721, 0
      %v750 = vsel %vm742, %v723, 0
      %v753 = vsel %vm742, %v725, 0
      %v756 = vsel %vm742, %v727, 0
      %v759 = vsel %vm742, %v729, 0
      %v762 = vsel %vm742, %v731, 0
      %v765 = vsel %vm742, %v733, 0
      %767 = vmatprep.subr.mxu0 0.0
      %768 = vmatpush1.msra.mxu0 %v734
      %769 = vmatprep.subr.mxu0 0.0
      %770 = vmatpush1.msra.mxu0 %v735
      %771 = vmatprep.subr.mxu0 0.0
      %772 = vmatpush1.msra.mxu0 %v736
      %773 = vmatprep.subr.mxu0 0.0
      %774 = vmatpush1.msra.mxu0 %v737
      %775 = vmatprep.subr.mxu0 0.0
      %776 = vmatpush1.msra.mxu0 %v738
      %777 = vmatprep.subr.mxu0 0.0
      %778 = vmatpush1.msra.mxu0 %v739
      %779 = vmatprep.subr.mxu0 0.0
      %780 = vmatpush1.msra.mxu0 %v740
      %781 = vmatprep.subr.mxu0 0.0
      %782 = vmatpush1.msra.mxu0 %v741
      %783 = vmatprep.subr.mxu0 0.0
      %784 = vmatpush1.msra.mxu0 0.0
      %785 = vmatprep.subr.mxu0 0.0
      %786 = vmatpush1.msra.mxu0 0.0
      %787 = vmatprep.subr.mxu0 0.0
      %788 = vmatpush1.msra.mxu0 0.0
      %789 = vmatprep.subr.mxu0 0.0
      %790 = vmatpush1.msra.mxu0 0.0
      %791 = vmatprep.subr.mxu0 0.0
      %792 = vmatpush1.msra.mxu0 0.0
      %793 = vmatprep.subr.mxu0 0.0
      %794 = vmatpush1.msra.mxu0 0.0
      %795 = vmatprep.subr.mxu0 0.0
      %796 = vmatpush1.msra.mxu0 0.0
      %797 = vmatprep.subr.mxu0 0.0
      %798 = vmatpush1.msra.mxu0 0.0
      %799 = vmatprep.subr.mxu0 0.0
      %800 = vmatpush1.msra.mxu0 0.0
      %801 = vmatprep.subr.mxu0 0.0
      %802 = vmatpush1.msra.mxu0 0.0
      %803 = vmatprep.subr.mxu0 0.0
      %804 = vmatpush1.msra.mxu0 0.0
      %805 = vmatprep.subr.mxu0 0.0
      %806 = vmatpush1.msra.mxu0 0.0
      %807 = vmatprep.subr.mxu0 0.0
      %808 = vmatpush1.msra.mxu0 0.0
      %809 = vmatprep.subr.mxu0 0.0
      %810 = vmatpush1.msra.mxu0 0.0
      %811 = vmatprep.subr.mxu0 0.0
      %812 = vmatpush1.msra.mxu0 0.0
      %813 = vmatprep.subr.mxu0 0.0
      %814 = vmatpush1.msra.mxu0 0.0
      %815 = vmatprep.subr.mxu0 0.0
      %816 = vmatpush1.msra.mxu0 0.0
      %817 = vmatprep.subr.mxu0 0.0
      %818 = vmatpush1.msra.mxu0 0.0
      %819 = vmatprep.subr.mxu0 0.0
      %820 = vmatpush1.msra.mxu0 0.0
      %821 = vmatprep.subr.mxu0 0.0
      %822 = vmatpush1.msra.mxu0 0.0
      %823 = vmatprep.subr.mxu0 0.0
      %824 = vmatpush1.msra.mxu0 0.0
      %825 = vmatprep.subr.mxu0 0.0
      %826 = vmatpush1.msra.mxu0 0.0
      %827 = vmatprep.subr.mxu0 0.0
      %828 = vmatpush1.msra.mxu0 0.0
      %829 = vmatprep.subr.mxu0 0.0
      %830 = vmatpush1.msra.mxu0 0.0
      %831 = vmatprep.mubr.f32.mxu0 0.0
      %832 = vmatmul.mubr.f32.gmra.mrb[0].mxu0 %v744
      %v833 = vpop.f32.mrb[0].mxu0
      %v834 = vadd.f32 0.0, %v833
      %v835 = vpop.f32.mrb[0].mxu0
      %836 = vmatprep.mubr.f32.mxu0 0.0
      %837 = vmatmul.mubr.f32.gmra.mrb[0].mxu0 %v747
      %v838 = vpop.f32.mrb[0].mxu0
      %v839 = vadd.f32 0.0, %v838
      %v840 = vpop.f32.mrb[0].mxu0
      %841 = vmatprep.mubr.f32.mxu0 0.0
      %842 = vmatmul.mubr.f32.gmra.mrb[0].mxu0 %v750
      %v843 = vpop.f32.mrb[0].mxu0
      %v844 = vadd.f32 0.0, %v843
      %v845 = vpop.f32.mrb[0].mxu0
      %846 = vmatprep.mubr.f32.mxu0 0.0
      %847 = vmatmul.mubr.f32.gmra.mrb[0].mxu0 %v753
      %v848 = vpop.f32.mrb[0].mxu0
      %v849 = vadd.f32 0.0, %v848
      %v850 = vpop.f32.mrb[0].mxu0
      %851 = vmatprep.mubr.f32.mxu0 0.0
      %852 = vmatmul.mubr.f32.gmra.mrb[0].mxu0 %v756
      %v853 = vpop.f32.mrb[0].mxu0
      %v854 = vadd.f32 0.0, %v853
      %v855 = vpop.f32.mrb[0].mxu0
      %856 = vmatprep.mubr.f32.mxu0 0.0
      %857 = vmatmul.mubr.f32.gmra.mrb[0].mxu0 %v759
      %v858 = vpop.f32.mrb[0].mxu0
      %v859 = vadd.f32 0.0, %v858
      %v860 = vpop.f32.mrb[0].mxu0
      %861 = vmatprep.mubr.f32.mxu0 0.0
      %862 = vmatmul.mubr.f32.gmra.mrb[0].mxu0 %v762
      %v863 = vpop.f32.mrb[0].mxu0
      %v864 = vadd.f32 0.0, %v863
      %v865 = vpop.f32.mrb[0].mxu0
      %866 = vmatprep.mubr.f32.mxu0 0.0
      %867 = vmatmul.mubr.f32.gmra.mrb[0].mxu0 %v765
      %v868 = vpop.f32.mrb[0].mxu0
      %v869 = vadd.f32 0.0, %v868
      %v870 = vpop.f32.mrb[0].mxu0
      %871 = vdwg.mxu0
      %v872 = vmax.f32 %v834, 1.1754944e-38
      %v873 = vmax.f32 %v839, 1.1754944e-38
      %v874 = vmax.f32 %v844, 1.1754944e-38
      %v875 = vmax.f32 %v849, 1.1754944e-38
      %v876 = vmax.f32 %v854, 1.1754944e-38
      %v877 = vmax.f32 %v859, 1.1754944e-38
      %v878 = vmax.f32 %v864, 1.1754944e-38
      %v879 = vmax.f32 %v869, 1.1754944e-38
      %v880 = vrcp.pop %v872
      %v881 = vrcp.pop %v873
      %v882 = vrcp.pop %v874
      %v883 = vrcp.pop %v875
      %v884 = vrcp.pop %v876
      %v885 = vrcp.pop %v877
      %v886 = vrcp.pop %v878
      %v887 = vrcp.pop %v879
      %v889 = vsel %vm454, %v880, 0
      %v892 = vsel %vm454, %v881, 0
      %v895 = vsel %vm454, %v882, 0
      %v898 = vsel %vm454, %v883, 0
      %v901 = vsel %vm454, %v884, 0
      %v904 = vsel %vm454, %v885, 0
      %v907 = vsel %vm454, %v886, 0
      %v910 = vsel %vm454, %v887, 0
      %912 = vmatprep.subr.mxu0 0.0
      %913 = vmatpush1.msra.mxu0 %v481
      %914 = vmatprep.subr.mxu0 0.0
      %915 = vmatpush1.msra.mxu0 0.0
      %916 = vmatprep.subr.mxu0 0.0
      %917 = vmatpush1.msra.mxu0 0.0
      %918 = vmatprep.subr.mxu0 0.0
      %919 = vmatpush1.msra.mxu0 0.0
      %920 = vmatprep.subr.mxu0 0.0
      %921 = vmatpush1.msra.mxu0 0.0
      %922 = vmatprep.subr.mxu0 0.0
      %923 = vmatpush1.msra.mxu0 0.0
      %924 = vmatprep.subr.mxu0 0.0
      %925 = vmatpush1.msra.mxu0 0.0
      %926 = vmatprep.subr.mxu0 0.0
      %927 = vmatpush1.msra.mxu0 0.0
      %928 = vmatprep.subr.mxu0 0.0
      %929 = vmatpush1.msra.mxu0 0.0
      %930 = vmatprep.subr.mxu0 0.0
      %931 = vmatpush1.msra.mxu0 0.0
      %932 = vmatprep.subr.mxu0 0.0
      %933 = vmatpush1.msra.mxu0 0.0
      %934 = vmatprep.subr.mxu0 0.0
      %935 = vmatpush1.msra.mxu0 0.0
      %936 = vmatprep.subr.mxu0 0.0
      %937 = vmatpush1.msra.mxu0 0.0
      %938 = vmatprep.subr.mxu0 0.0
      %939 = vmatpush1.msra.mxu0 0.0
      %940 = vmatprep.subr.mxu0 0.0
      %941 = vmatpush1.msra.mxu0 0.0
      %942 = vmatprep.subr.mxu0 0.0
      %943 = vmatpush1.msra.mxu0 0.0
      %944 = vmatprep.subr.mxu0 0.0
      %945 = vmatpush1.msra.mxu0 0.0
      %946 = vmatprep.subr.mxu0 0.0
      %947 = vmatpush1.msra.mxu0 0.0
      %948 = vmatprep.subr.mxu0 0.0
      %949 = vmatpush1.msra.mxu0 0.0
      %950 = vmatprep.subr.mxu0 0.0
      %951 = vmatpush1.msra.mxu0 0.0
      %952 = vmatprep.subr.mxu0 0.0
      %953 = vmatpush1.msra.mxu0 0.0
      %954 = vmatprep.subr.mxu0 0.0
      %955 = vmatpush1.msra.mxu0 0.0
      %956 = vmatprep.subr.mxu0 0.0
      %957 = vmatpush1.msra.mxu0 0.0
      %958 = vmatprep.subr.mxu0 0.0
      %959 = vmatpush1.msra.mxu0 0.0
      %960 = vmatprep.subr.mxu0 0.0
      %961 = vmatpush1.msra.mxu0 0.0
      %962 = vmatprep.subr.mxu0 0.0
      %963 = vmatpush1.msra.mxu0 0.0
      %964 = vmatprep.subr.mxu0 0.0
      %965 = vmatpush1.msra.mxu0 0.0
      %966 = vmatprep.subr.mxu0 0.0
      %967 = vmatpush1.msra.mxu0 0.0
      %968 = vmatprep.subr.mxu0 0.0
      %969 = vmatpush1.msra.mxu0 0.0
      %970 = vmatprep.subr.mxu0 0.0
      %971 = vmatpush1.msra.mxu0 0.0
      %972 = vmatprep.subr.mxu0 0.0
      %973 = vmatpush1.msra.mxu0 0.0
      %974 = vmatprep.subr.mxu0 0.0
      %975 = vmatpush1.msra.mxu0 0.0
      %976 = vmatprep.mubr.f32.mxu0 0.0
      %977 = vmatmul.mubr.f32.gmra.mrb[0].mxu0 %v889
      %v978 = vpop.f32.mrb[0].mxu0
      %v979 = vadd.f32 0.0, %v978
      %v980 = vpop.f32.mrb[0].mxu0
      %981 = vmatprep.mubr.f32.mxu0 0.0
      %982 = vmatmul.mubr.f32.gmra.mrb[0].mxu0 %v892
      %v983 = vpop.f32.mrb[0].mxu0
      %v984 = vadd.f32 0.0, %v983
      %v985 = vpop.f32.mrb[0].mxu0
      %986 = vmatprep.mubr.f32.mxu0 0.0
      %987 = vmatmul.mubr.f32.gmra.mrb[0].mxu0 %v895
      %v988 = vpop.f32.mrb[0].mxu0
      %v989 = vadd.f32 0.0, %v988
      %v990 = vpop.f32.mrb[0].mxu0
      %991 = vmatprep.mubr.f32.mxu0 0.0
      %992 = vmatmul.mubr.f32.gmra.mrb[0].mxu0 %v898
      %v993 = vpop.f32.mrb[0].mxu0
      %v994 = vadd.f32 0.0, %v993
      %v995 = vpop.f32.mrb[0].mxu0
      %996 = vmatprep.mubr.f32.mxu0 0.0
      %997 = vmatmul.mubr.f32.gmra.mrb[0].mxu0 %v901
      %v998 = vpop.f32.mrb[0].mxu0
      %v999 = vadd.f32 0.0, %v998
      %v1000 = vpop.f32.mrb[0].mxu0
      %1001 = vmatprep.mubr.f32.mxu0 0.0
      %1002 = vmatmul.mubr.f32.gmra.mrb[0].mxu0 %v904
      %v1003 = vpop.f32.mrb[0].mxu0
      %v1004 = vadd.f32 0.0, %v1003
      %v1005 = vpop.f32.mrb[0].mxu0
      %1006 = vmatprep.mubr.f32.mxu0 0.0
      %1007 = vmatmul.mubr.f32.gmra.mrb[0].mxu0 %v907
      %v1008 = vpop.f32.mrb[0].mxu0
      %v1009 = vadd.f32 0.0, %v1008
      %v1010 = vpop.f32.mrb[0].mxu0
      %1011 = vmatprep.mubr.f32.mxu0 0.0
      %1012 = vmatmul.mubr.f32.gmra.mrb[0].mxu0 %v910
      %v1013 = vpop.f32.mrb[0].mxu0
      %v1014 = vadd.f32 0.0, %v1013
      %v1015 = vpop.f32.mrb[0].mxu0
      %1016 = vdwg.mxu0
      %v1017 = vmul.f32 %v719, %v979
      %v1018 = vmul.f32 %v721, %v984
      %v1019 = vmul.f32 %v723, %v989
      %v1020 = vmul.f32 %v725, %v994
      %v1021 = vmul.f32 %v727, %v999
      %v1022 = vmul.f32 %v729, %v1004
      %v1023 = vmul.f32 %v731, %v1009
      %v1024 = vmul.f32 %v733, %v1014
      %v1025 = vpack.c.bf16 %v1018, %v1017
      %v1026 = vpack.c.bf16 %v1020, %v1019
      %v1027 = vpack.c.bf16 %v1022, %v1021
      %v1028 = vpack.c.bf16 %v1024, %v1023
      %v1029 = vld [vmem:[%s6] sm:$0xf]
      %v1030 = vld [vmem:[%s6 + $0x4] sm:$0xf]
      %v1031 = vld [vmem:[%s6 + $0x8] sm:$0xf]
      %v1032 = vld [vmem:[%s6 + $0xc] sm:$0xf]
      %v1033 = vld [vmem:[%s6 + $0x10] sm:$0xf]
      %v1034 = vld [vmem:[%s6 + $0x14] sm:$0xf]
      %v1035 = vld [vmem:[%s6 + $0x18] sm:$0xf]
      %v1036 = vld [vmem:[%s6 + $0x1c] sm:$0xf]
      %v1037 = vld [vmem:[%s7] sm:$0x1]
      %v1039 = vlaneseq
      %v1040 = vshrl.u32 %v1039, 7
      %v1041 = vsub.s32 0, %v1040
      %v1042 = vrot.slane %v1037, %v1041
      %v1052 = vunpack.c.l.b16 %v1029
      %v1053 = vunpack.c.l.b16 %v1030
      %v1054 = vunpack.c.l.b16 %v1031
      %v1055 = vunpack.c.l.b16 %v1032
      %v1056 = vunpack.c.l.b16 %v1033
      %v1057 = vunpack.c.l.b16 %v1034
      %v1058 = vunpack.c.l.b16 %v1035
      %v1059 = vunpack.c.l.b16 %v1036
      %v1060 = vpack.c.b16 %v1053, %v1052
      %v1061 = vpack.c.b16 %v1055, %v1054
      %v1062 = vpack.c.b16 %v1057, %v1056
      %v1063 = vpack.c.b16 %v1059, %v1058
      %v1069 = vsel %vm742, %v1025, 0
      %v1072 = vsel %vm742, %v1026, 0
      %v1075 = vsel %vm742, %v1027, 0
      %v1078 = vsel %vm742, %v1028, 0
      %1080 = vmatprep.subr.bf16.mxu0 0
      %1081 = vmatpush1.bf16.msra.mxu0 %v1060
      %1082 = vmatprep.subr.bf16.mxu0 0
      %1083 = vmatpush1.bf16.msra.mxu0 %v1061
      %1084 = vmatprep.subr.bf16.mxu0 0
      %1085 = vmatpush1.bf16.msra.mxu0 %v1062
      %1086 = vmatprep.subr.bf16.mxu0 0
      %1087 = vmatpush1.bf16.msra.mxu0 %v1063
      %1088 = vmatprep.subr.bf16.mxu0 0
      %1089 = vmatpush1.bf16.msra.mxu0 0
      %1090 = vmatprep.subr.bf16.mxu0 0
      %1091 = vmatpush1.bf16.msra.mxu0 0
      %1092 = vmatprep.subr.bf16.mxu0 0
      %1093 = vmatpush1.bf16.msra.mxu0 0
      %1094 = vmatprep.subr.bf16.mxu0 0
      %1095 = vmatpush1.bf16.msra.mxu0 0
      %1096 = vmatprep.subr.bf16.mxu0 0
      %1097 = vmatpush1.bf16.msra.mxu0 0
      %1098 = vmatprep.subr.bf16.mxu0 0
      %1099 = vmatpush1.bf16.msra.mxu0 0
      %1100 = vmatprep.subr.bf16.mxu0 0
      %1101 = vmatpush1.bf16.msra.mxu0 0
      %1102 = vmatprep.subr.bf16.mxu0 0
      %1103 = vmatpush1.bf16.msra.mxu0 0
      %1104 = vmatprep.subr.bf16.mxu0 0
      %1105 = vmatpush1.bf16.msra.mxu0 0
      %1106 = vmatprep.subr.bf16.mxu0 0
      %1107 = vmatpush1.bf16.msra.mxu0 0
      %1108 = vmatprep.subr.bf16.mxu0 0
      %1109 = vmatpush1.bf16.msra.mxu0 0
      %1110 = vmatprep.subr.bf16.mxu0 0
      %1111 = vmatpush1.bf16.msra.mxu0 0
      %1112 = vmatprep.mubr.bf16.mxu0 0
      %1113 = vmatmul.mubr.bf16.gmra.mrb[0].mxu0 %v1069
      %v1114 = vpop.f32.mrb[0].mxu0
      %v1115 = vadd.f32 %v1042, %v1114
      %v1116 = vpop.f32.mrb[0].mxu0
      %v1117 = vpop.f32.mrb[0].mxu0
      %v1118 = vadd.f32 %v1042, %v1117
      %v1119 = vpop.f32.mrb[0].mxu0
      %1120 = vmatprep.mubr.bf16.mxu0 0
      %1121 = vmatmul.mubr.bf16.gmra.mrb[0].mxu0 %v1072
      %v1122 = vpop.f32.mrb[0].mxu0
      %v1123 = vadd.f32 %v1042, %v1122
      %v1124 = vpop.f32.mrb[0].mxu0
      %v1125 = vpop.f32.mrb[0].mxu0
      %v1126 = vadd.f32 %v1042, %v1125
      %v1127 = vpop.f32.mrb[0].mxu0
      %1128 = vmatprep.mubr.bf16.mxu0 0
      %1129 = vmatmul.mubr.bf16.gmra.mrb[0].mxu0 %v1075
      %v1130 = vpop.f32.mrb[0].mxu0
      %v1131 = vadd.f32 %v1042, %v1130
      %v1132 = vpop.f32.mrb[0].mxu0
      %v1133 = vpop.f32.mrb[0].mxu0
      %v1134 = vadd.f32 %v1042, %v1133
      %v1135 = vpop.f32.mrb[0].mxu0
      %1136 = vmatprep.mubr.bf16.mxu0 0
      %1137 = vmatmul.mubr.bf16.gmra.mrb[0].mxu0 %v1078
      %v1138 = vpop.f32.mrb[0].mxu0
      %v1139 = vadd.f32 %v1042, %v1138
      %v1140 = vpop.f32.mrb[0].mxu0
      %v1141 = vpop.f32.mrb[0].mxu0
      %v1142 = vadd.f32 %v1042, %v1141
      %v1143 = vpop.f32.mrb[0].mxu0
      %1144 = vdwg.mxu0
      %v1145 = vmax.f32 %v1115, 0.0
      %v1146 = vmax.f32 %v1118, 0.0
      %v1147 = vmax.f32 %v1123, 0.0
      %v1148 = vmax.f32 %v1126, 0.0
      %v1149 = vmax.f32 %v1131, 0.0
      %v1150 = vmax.f32 %v1134, 0.0
      %v1151 = vmax.f32 %v1139, 0.0
      %v1152 = vmax.f32 %v1142, 0.0
      %1153 = vst [vmem:[%s307] sm:$0xff] %v1145
      %1154 = vst [vmem:[%s307 + $0x8] sm:$0xff] %v1146
      %1155 = vst [vmem:[%s307 + $0x10] sm:$0xff] %v1147
      %1156 = vst [vmem:[%s307 + $0x18] sm:$0xff] %v1148
      %1157 = vst [vmem:[%s307 + $0x20] sm:$0xff] %v1149
      %1158 = vst [vmem:[%s307 + $0x28] sm:$0xff] %v1150
      %1159 = vst [vmem:[%s307 + $0x30] sm:$0xff] %v1151
      %1160 = vst [vmem:[%s307 + $0x38] sm:$0xff] %v1152
      %s1161 = smul.u32 8, %s19
      %p1162 = scmp.lt.s32.totalorder %s1161, 15
      %s1163 = scalar_select %p1162, %s1161, 15
      %s1164 = smul.addr %s1163, 8
      %s1165 = scalar_lea.vmem %s8, %s1164
      // Predicated region
      $region53: #{amm_basic_block.2} parent=51 // pred_check
        %p1166 = pneg %p210
      $region54: #{amm_basic_block.2} parent=51 // pred_check_branch
        %1168 = sbr.rel (%p1166) target = $region56
      $region55: #{amm_basic_block.2} parent=51 // pred_region
        %s1169 = smul.u32 8, %s19
      $region56: #{amm_basic_block.2} parent=51 // pred_fallthru
        _
    $region52: #{amm_basic_block.2} parent=5 // pred_fallthru
      _
    %p1170 = scmp.le.s32.totalorder 2, %s14
    // Predicated region
    $region57: #{amm_basic_block.2} parent=5 // pred_check
      %p1171 = pneg %p1170
    $region58: #{amm_basic_block.2} parent=5 // pred_check_branch
      %1173 = sbr.rel (%p1171) target = $region60
    $region59: #{amm_basic_block.2} parent=5 // pred_region
      %s1174 = ssub.s32 %s14, 2
      // Predicated region
      $region61: #{amm_basic_block.2} parent=59 // pred_check
        %p1175 = pneg %p216
      $region62: #{amm_basic_block.2} parent=59 // pred_check_branch
        %1177 = sbr.rel (%p1175) target = $region64
      $region63: #{amm_basic_block.2} parent=59 // pred_region
        %s1178 = smul.u32 8, %s20
        %p1179 = scmp.lt.s32.totalorder %s1178, 15
        %s1180 = scalar_select %p1179, %s1178, 15
        %s1181 = smul.addr %s1180, 8
        %s1182 = scalar_lea.vmem %s8, %s1181
      $region64: #{amm_basic_block.2} parent=59 // pred_fallthru
        _
    $region60: #{amm_basic_block.2} parent=5 // pred_fallthru
      _
  $region6: #{amm_basic_block.2} parent=0 // loop_footer
    %s18 = sadd.s32 1, %s14
  $region7: #{amm_basic_block.2} parent=0 // loop_footer_branch
    %13 = sbr.rel target = $region3
  $region8: #{amm_basic_block.2} parent=0 // loop_exit
    _

// kernel: amm_basic_block.3
$region0: #{amm_basic_block.3}
  #allocation0 [shape = 'u32[]', space=smem, size = 0x4, offset = 0x4, fixed_abs, tag = 'smem constant byte address 0x4 - core index']
  #allocation1 [shape = 'u32[144,128]{1,0:T(1,128)}', space=vmem, size = 0x12000, scoped, tag = 'internal scratch']
  %s0 = inlined_call_operand.vmem [shape: bf16[128,72], index: 0, kind: input, shape index: {}]
  %s1 = inlined_call_operand.vmem [shape: bf16[1,72,128], index: 1, kind: input, shape index: {}]
  %s2 = inlined_call_operand.vmem [shape: bf16[1,72,8], index: 2, kind: input, shape index: {}]
  %s3 = inlined_call_operand.vmem [shape: f32[1,1,128], index: 3, kind: input, shape index: {}]
  %s4 = inlined_call_operand.vmem [shape: f32[128,8], index: 4, kind: input, shape index: {}]
  %s5 = inlined_call_operand.vmem [shape: f32[8,128], index: 5, kind: input, shape index: {}]
  %s6 = inlined_call_operand.vmem [shape: bf16[1,128,128], index: 6, kind: input, shape index: {}]
  %s7 = inlined_call_operand.vmem [shape: f32[1,128], index: 7, kind: input, shape index: {}]
  %s8 = inlined_call_operand.vmem [shape: f32[128,128], index: 8, kind: input, shape index: {}]
  %s9 = inlined_call_operand.vmem [shape: f32[128,128], index: 9, kind: output, shape index: {}]
  %s10 = sld [smem:[#allocation0]]
  $region69: #{amm_basic_block.3} parent=0
    _
  %s12 = ssub.s32 1, %s10
  %s13 = scalar_select 0, %s12, %s10
  loop: start=0, step=1, limit=4
  $region2: #{amm_basic_block.3} parent=0 // loop_pre_header
    _
  $region3: #{amm_basic_block.3} parent=0 // loop_header
    %s15 = sphi 0, %s19
    %p16 = scmp.ge.s32.totalorder %s15, 4
    %s25 = sphi 0, %s27
    %s28 = sphi 0, %s25
    %s29 = sphi 0, %s28
    %s45 = sphi 0, %s29
    %s49 = sphi 0, %s49
    %s51 = sphi 0, %s49
    %s52 = sphi 0, %s51
    %s66 = sphi 0, %s52
    %s70 = sphi 0, %s70
    %s72 = sphi 0, %s70
    %s73 = sphi 0, %s72
    %s87 = sphi 0, %s73
    %s91 = sphi 0, %s91
    %s93 = sphi 0, %s91
    %s94 = sphi 0, %s93
    %s108 = sphi 0, %s94
    %s112 = sphi 0, %s112
    %s114 = sphi 0, %s112
    %s115 = sphi 0, %s114
    %s129 = sphi 0, %s115
    %s133 = sphi 0, %s133
    %s135 = sphi 0, %s133
    %s136 = sphi 0, %s135
    %s150 = sphi 0, %s136
    %s154 = sphi 0, %s154
    %s156 = sphi 0, %s154
    %s157 = sphi 0, %s156
    %s171 = sphi 0, %s157
    %s175 = sphi 0, %s175
    %s177 = sphi 0, %s175
    %s178 = sphi 0, %s177
    %s192 = sphi 0, %s178
    %s198 = sphi 0, %s200
    %s201 = sphi 0, %s198
    %s202 = sphi 0, %s201
    %s218 = sphi 0, %s202
    %s224 = sphi 0, %s226
    %s227 = sphi 0, %s224
    %s228 = sphi 0, %s227
    %s244 = sphi 0, %s228
  $region4: #{amm_basic_block.3} parent=0 // loop_header_branch
    %18 = sbr.rel (%p16) target = $region8
  $region5: #{amm_basic_block.3} parent=0 // loop_body
    %s20 = ssub.s32 %s15, 1
    %s21 = ssub.s32 %s15, 2
    %s22 = sadd.s32 %s15, 1
    %s23 = ssub.s32 %s15, %s22
    %p24 = scmp.eq.s32.totalorder %s23, 0
    %s26 = sadd.s32 %s25, 1
    %s27 = scalar_select %p24, %s25, %s26
    %p30 = pneg %p24
    %p31 = scmp.eq.s32.totalorder %s15, 1
    %p32 = por %p30, %p31
    %p33 = scmp.ne.s32.totalorder %s25, %s28
    %p34 = scmp.eq.s32.totalorder %s15, 0
    %p35 = por %p33, %p34
    %p36 = scmp.ne.s32.totalorder %s25, %s28
    %p37 = scmp.eq.s32.totalorder %s20, 1
    %p38 = por %p36, %p37
    %p39 = scmp.ne.s32.totalorder %s28, %s29
    %p40 = scmp.eq.s32.totalorder %s20, 0
    %p41 = por %p39, %p40
    %p42 = scmp.ne.s32.totalorder %s28, %s29
    %p43 = scmp.eq.s32.totalorder %s21, 1
    %p44 = por %p42, %p43
    %p46 = scmp.ne.s32.totalorder %s29, %s45
    %p47 = scmp.eq.s32.totalorder %s21, 0
    %p48 = por %p46, %p47
    %s50 = sadd.s32 %s49, 1
    %p53 = scmp.eq.s32.totalorder %s15, 1
    %p54 = scmp.ne.s32.totalorder %s49, %s51
    %p55 = scmp.eq.s32.totalorder %s15, 0
    %p56 = por %p54, %p55
    %p57 = scmp.ne.s32.totalorder %s49, %s51
    %p58 = scmp.eq.s32.totalorder %s20, 1
    %p59 = por %p57, %p58
    %p60 = scmp.ne.s32.totalorder %s51, %s52
    %p61 = scmp.eq.s32.totalorder %s20, 0
    %p62 = por %p60, %p61
    %p63 = scmp.ne.s32.totalorder %s51, %s52
    %p64 = scmp.eq.s32.totalorder %s21, 1
    %p65 = por %p63, %p64
    %p67 = scmp.ne.s32.totalorder %s52, %s66
    %p68 = scmp.eq.s32.totalorder %s21, 0
    %p69 = por %p67, %p68
    %s71 = sadd.s32 %s70, 1
    %p74 = scmp.eq.s32.totalorder %s15, 1
    %p75 = scmp.ne.s32.totalorder %s70, %s72
    %p76 = scmp.eq.s32.totalorder %s15, 0
    %p77 = por %p75, %p76
    %p78 = scmp.ne.s32.totalorder %s70, %s72
    %p79 = scmp.eq.s32.totalorder %s20, 1
    %p80 = por %p78, %p79
    %p81 = scmp.ne.s32.totalorder %s72, %s73
    %p82 = scmp.eq.s32.totalorder %s20, 0
    %p83 = por %p81, %p82
    %p84 = scmp.ne.s32.totalorder %s72, %s73
    %p85 = scmp.eq.s32.totalorder %s21, 1
    %p86 = por %p84, %p85
    %p88 = scmp.ne.s32.totalorder %s73, %s87
    %p89 = scmp.eq.s32.totalorder %s21, 0
    %p90 = por %p88, %p89
    %s92 = sadd.s32 %s91, 1
    %p95 = scmp.eq.s32.totalorder %s15, 1
    %p96 = scmp.ne.s32.totalorder %s91, %s93
    %p97 = scmp.eq.s32.totalorder %s15, 0
    %p98 = por %p96, %p97
    %p99 = scmp.ne.s32.totalorder %s91, %s93
    %p100 = scmp.eq.s32.totalorder %s20, 1
    %p101 = por %p99, %p100
    %p102 = scmp.ne.s32.totalorder %s93, %s94
    %p103 = scmp.eq.s32.totalorder %s20, 0
    %p104 = por %p102, %p103
    %p105 = scmp.ne.s32.totalorder %s93, %s94
    %p106 = scmp.eq.s32.totalorder %s21, 1
    %p107 = por %p105, %p106
    %p109 = scmp.ne.s32.totalorder %s94, %s108
    %p110 = scmp.eq.s32.totalorder %s21, 0
    %p111 = por %p109, %p110
    %s113 = sadd.s32 %s112, 1
    %p116 = scmp.eq.s32.totalorder %s15, 1
    %p117 = scmp.ne.s32.totalorder %s112, %s114
    %p118 = scmp.eq.s32.totalorder %s15, 0
    %p119 = por %p117, %p118
    %p120 = scmp.ne.s32.totalorder %s112, %s114
    %p121 = scmp.eq.s32.totalorder %s20, 1
    %p122 = por %p120, %p121
    %p123 = scmp.ne.s32.totalorder %s114, %s115
    %p124 = scmp.eq.s32.totalorder %s20, 0
    %p125 = por %p123, %p124
    %p126 = scmp.ne.s32.totalorder %s114, %s115
    %p127 = scmp.eq.s32.totalorder %s21, 1
    %p128 = por %p126, %p127
    %p130 = scmp.ne.s32.totalorder %s115, %s129
    %p131 = scmp.eq.s32.totalorder %s21, 0
    %p132 = por %p130, %p131
    %s134 = sadd.s32 %s133, 1
    %p137 = scmp.eq.s32.totalorder %s15, 1
    %p138 = scmp.ne.s32.totalorder %s133, %s135
    %p139 = scmp.eq.s32.totalorder %s15, 0
    %p140 = por %p138, %p139
    %p141 = scmp.ne.s32.totalorder %s133, %s135
    %p142 = scmp.eq.s32.totalorder %s20, 1
    %p143 = por %p141, %p142
    %p144 = scmp.ne.s32.totalorder %s135, %s136
    %p145 = scmp.eq.s32.totalorder %s20, 0
    %p146 = por %p144, %p145
    %p147 = scmp.ne.s32.totalorder %s135, %s136
    %p148 = scmp.eq.s32.totalorder %s21, 1
    %p149 = por %p147, %p148
    %p151 = scmp.ne.s32.totalorder %s136, %s150
    %p152 = scmp.eq.s32.totalorder %s21, 0
    %p153 = por %p151, %p152
    %s155 = sadd.s32 %s154, 1
    %p158 = scmp.eq.s32.totalorder %s15, 1
    %p159 = scmp.ne.s32.totalorder %s154, %s156
    %p160 = scmp.eq.s32.totalorder %s15, 0
    %p161 = por %p159, %p160
    %p162 = scmp.ne.s32.totalorder %s154, %s156
    %p163 = scmp.eq.s32.totalorder %s20, 1
    %p164 = por %p162, %p163
    %p165 = scmp.ne.s32.totalorder %s156, %s157
    %p166 = scmp.eq.s32.totalorder %s20, 0
    %p167 = por %p165, %p166
    %p168 = scmp.ne.s32.totalorder %s156, %s157
    %p169 = scmp.eq.s32.totalorder %s21, 1
    %p170 = por %p168, %p169
    %p172 = scmp.ne.s32.totalorder %s157, %s171
    %p173 = scmp.eq.s32.totalorder %s21, 0
    %p174 = por %p172, %p173
    %s176 = sadd.s32 %s175, 1
    %p179 = scmp.eq.s32.totalorder %s15, 1
    %p180 = scmp.ne.s32.totalorder %s175, %s177
    %p181 = scmp.eq.s32.totalorder %s15, 0
    %p182 = por %p180, %p181
    %p183 = scmp.ne.s32.totalorder %s175, %s177
    %p184 = scmp.eq.s32.totalorder %s20, 1
    %p185 = por %p183, %p184
    %p186 = scmp.ne.s32.totalorder %s177, %s178
    %p187 = scmp.eq.s32.totalorder %s20, 0
    %p188 = por %p186, %p187
    %p189 = scmp.ne.s32.totalorder %s177, %s178
    %p190 = scmp.eq.s32.totalorder %s21, 1
    %p191 = por %p189, %p190
    %p193 = scmp.ne.s32.totalorder %s178, %s192
    %p194 = scmp.eq.s32.totalorder %s21, 0
    %p195 = por %p193, %p194
    %s196 = ssub.s32 %s15, %s22
    %p197 = scmp.eq.s32.totalorder %s196, 0
    %s199 = sadd.s32 %s198, 1
    %s200 = scalar_select %p197, %s198, %s199
    %p203 = pneg %p197
    %p204 = scmp.eq.s32.totalorder %s15, 1
    %p205 = por %p203, %p204
    %p206 = scmp.ne.s32.totalorder %s198, %s201
    %p207 = scmp.eq.s32.totalorder %s15, 0
    %p208 = por %p206, %p207
    %p209 = scmp.ne.s32.totalorder %s198, %s201
    %p210 = scmp.eq.s32.totalorder %s20, 1
    %p211 = por %p209, %p210
    %p212 = scmp.ne.s32.totalorder %s201, %s202
    %p213 = scmp.eq.s32.totalorder %s20, 0
    %p214 = por %p212, %p213
    %p215 = scmp.ne.s32.totalorder %s201, %s202
    %p216 = scmp.eq.s32.totalorder %s21, 1
    %p217 = por %p215, %p216
    %p219 = scmp.ne.s32.totalorder %s202, %s218
    %p220 = scmp.eq.s32.totalorder %s21, 0
    %p221 = por %p219, %p220
    %s222 = ssub.s32 %s15, %s22
    %p223 = scmp.eq.s32.totalorder %s222, 0
    %s225 = sadd.s32 %s224, 1
    %s226 = scalar_select %p223, %s224, %s225
    %p229 = pneg %p223
    %p230 = scmp.eq.s32.totalorder %s15, 1
    %p231 = por %p229, %p230
    %p232 = scmp.ne.s32.totalorder %s224, %s227
    %p233 = scmp.eq.s32.totalorder %s15, 0
    %p234 = por %p232, %p233
    %p235 = scmp.ne.s32.totalorder %s224, %s227
    %p236 = scmp.eq.s32.totalorder %s20, 1
    %p237 = por %p235, %p236
    %p238 = scmp.ne.s32.totalorder %s227, %s228
    %p239 = scmp.eq.s32.totalorder %s20, 0
    %p240 = por %p238, %p239
    %p241 = scmp.ne.s32.totalorder %s227, %s228
    %p242 = scmp.eq.s32.totalorder %s21, 1
    %p243 = por %p241, %p242
    %p245 = scmp.ne.s32.totalorder %s228, %s244
    %p246 = scmp.eq.s32.totalorder %s21, 0
    %p247 = por %p245, %p246
    %p248 = scmp.le.s32.totalorder 1, %s15
    %p249 = scmp.lt.s32.totalorder %s15, 3
    %p250 = pnand %p248, %p249
    %p251 = pneg %p250
    // Predicated region
    $region9: #{amm_basic_block.3} parent=5 // pred_check
      _
    $region10: #{amm_basic_block.3} parent=5 // pred_check_branch
      %253 = sbr.rel (%p250) target = $region12
    $region11: #{amm_basic_block.3} parent=5 // pred_region
      %s254 = ssub.s32 %s15, 1
      // Predicated region
      $region13: #{amm_basic_block.3} parent=11 // pred_check
        %p255 = pneg %p62
      $region14: #{amm_basic_block.3} parent=11 // pred_check_branch
        %257 = sbr.rel (%p255) target = $region16
      $region15: #{amm_basic_block.3} parent=11 // pred_region
        _
      $region16: #{amm_basic_block.3} parent=11 // pred_fallthru
        _
      // Predicated region
      $region17: #{amm_basic_block.3} parent=11 // pred_check
        %p258 = pneg %p83
      $region18: #{amm_basic_block.3} parent=11 // pred_check_branch
        %260 = sbr.rel (%p258) target = $region20
      $region19: #{amm_basic_block.3} parent=11 // pred_region
        _
      $region20: #{amm_basic_block.3} parent=11 // pred_fallthru
        _
      // Predicated region
      $region21: #{amm_basic_block.3} parent=11 // pred_check
        %p261 = pneg %p104
      $region22: #{amm_basic_block.3} parent=11 // pred_check_branch
        %263 = sbr.rel (%p261) target = $region24
      $region23: #{amm_basic_block.3} parent=11 // pred_region
        _
      $region24: #{amm_basic_block.3} parent=11 // pred_fallthru
        _
      // Predicated region
      $region25: #{amm_basic_block.3} parent=11 // pred_check
        %p264 = pneg %p125
      $region26: #{amm_basic_block.3} parent=11 // pred_check_branch
        %266 = sbr.rel (%p264) target = $region28
      $region27: #{amm_basic_block.3} parent=11 // pred_region
        _
      $region28: #{amm_basic_block.3} parent=11 // pred_fallthru
        _
      // Predicated region
      $region29: #{amm_basic_block.3} parent=11 // pred_check
        %p267 = pneg %p146
      $region30: #{amm_basic_block.3} parent=11 // pred_check_branch
        %269 = sbr.rel (%p267) target = $region32
      $region31: #{amm_basic_block.3} parent=11 // pred_region
        _
      $region32: #{amm_basic_block.3} parent=11 // pred_fallthru
        _
      // Predicated region
      $region33: #{amm_basic_block.3} parent=11 // pred_check
        %p270 = pneg %p167
      $region34: #{amm_basic_block.3} parent=11 // pred_check_branch
        %272 = sbr.rel (%p270) target = $region36
      $region35: #{amm_basic_block.3} parent=11 // pred_region
        _
      $region36: #{amm_basic_block.3} parent=11 // pred_fallthru
        _
      // Predicated region
      $region37: #{amm_basic_block.3} parent=11 // pred_check
        %p273 = pneg %p188
      $region38: #{amm_basic_block.3} parent=11 // pred_check_branch
        %275 = sbr.rel (%p273) target = $region40
      $region39: #{amm_basic_block.3} parent=11 // pred_region
        _
      $region40: #{amm_basic_block.3} parent=11 // pred_fallthru
        _
    $region12: #{amm_basic_block.3} parent=5 // pred_fallthru
      _
    %p276 = scmp.lt.s32.totalorder %s15, 2
    // Predicated region
    $region41: #{amm_basic_block.3} parent=5 // pred_check
      %p277 = pneg %p276
    $region42: #{amm_basic_block.3} parent=5 // pred_check_branch
      %279 = sbr.rel (%p277) target = $region44
    $region43: #{amm_basic_block.3} parent=5 // pred_region
      // Predicated region
      $region45: #{amm_basic_block.3} parent=43 // pred_check
        %p280 = pneg %p35
      $region46: #{amm_basic_block.3} parent=43 // pred_check_branch
        %282 = sbr.rel (%p280) target = $region48
      $region47: #{amm_basic_block.3} parent=43 // pred_region
        %s283 = smul.u32 8, %s15
        %p284 = scmp.lt.s32.totalorder %s283, 15
        %s285 = scalar_select %p284, %s283, 15
        %s286 = smul.addr %s285, 4
        %s287 = scalar_lea.vmem %s0, %s286
        %s288 = smul.u32 8, %s15
      $region48: #{amm_basic_block.3} parent=43 // pred_fallthru
        _
      // Predicated region
      $region49: #{amm_basic_block.3} parent=43 // pred_check
        %p289 = pneg %p208
      $region50: #{amm_basic_block.3} parent=43 // pred_check_branch
        %291 = sbr.rel (%p289) target = $region52
      $region51: #{amm_basic_block.3} parent=43 // pred_region
        %s292 = smul.u32 8, %s15
        %p293 = scmp.lt.s32.totalorder %s292, 15
        %s294 = scalar_select %p293, %s292, 15
        %s295 = smul.addr %s294, 8
        %s296 = scalar_lea.vmem %s8, %s295
        %s297 = smul.u32 8, %s15
      $region52: #{amm_basic_block.3} parent=43 // pred_fallthru
        _
    $region44: #{amm_basic_block.3} parent=5 // pred_fallthru
      _
    %p298 = scmp.le.s32.totalorder 1, %s15
    %p299 = scmp.lt.s32.totalorder %s15, 3
    %p300 = pnand %p298, %p299
    %p301 = pneg %p300
    // Predicated region
    $region53: #{amm_basic_block.3} parent=5 // pred_check
      _
    $region54: #{amm_basic_block.3} parent=5 // pred_check_branch
      %303 = sbr.rel (%p300) target = $region56
    $region55: #{amm_basic_block.3} parent=5 // pred_region
      %s304 = ssub.s32 %s15, 1
      %s305 = smul.u32 8, %s20
      %p306 = scmp.lt.s32.totalorder %s305, 15
      %s307 = scalar_select %p306, %s305, 15
      %s308 = smul.addr %s307, 4
      %s309 = scalar_lea.vmem %s0, %s308
      %p310 = pneg %p41
      %p311 = pneg %p38
      %p312 = pneg %p62
      %p313 = pneg %p59
      %p314 = pneg %p83
      %p315 = pneg %p80
      %p316 = pneg %p104
      %p317 = pneg %p101
      %p318 = pneg %p125
      %p319 = pneg %p122
      %p320 = pneg %p146
      %p321 = pneg %p143
      %p322 = pneg %p167
      %p323 = pneg %p164
      %p324 = pneg %p188
      %p325 = pneg %p185
      %s326 = smul.u32 8, %s20
      %p327 = scmp.lt.s32.totalorder %s326, 15
      %s328 = scalar_select %p327, %s326, 15
      %s329 = smul.addr %s328, 8
      %s330 = scalar_lea.vmem %s8, %s329
      %p331 = pneg %p214
      %p332 = pneg %p211
      %p333 = pneg %p240
      %p334 = pneg %p237
      %s335 = smul.u32 8, %s20
      %p336 = scmp.lt.s32.totalorder %s335, 15
      %s337 = scalar_select %p336, %s335, 15
      %s338 = smul.addr %s337, 8
      %s339 = scalar_lea.vmem %s9, %s338
      %s340 = smul.u32 8, %s20
      %p341 = scmp.lt.s32.totalorder %s340, 15
      %s342 = scalar_select %p341, %s340, 15
      %s343 = smul.addr %s342, 4
      %s344 = scalar_lea.vmem %s0, %s343
      %s345 = smul.u32 8, %s20
      %s346 = smul.u32 8, %s20
      %p347 = scmp.lt.s32.totalorder %s346, 15
      %s348 = scalar_select %p347, %s346, 15
      %s349 = smul.addr %s348, 8
      %s350 = scalar_lea.vmem %s8, %s349
      %s351 = smul.u32 8, %s20
      %s352 = smul.u32 8, %s20
      %p353 = scmp.lt.s32.totalorder %s352, 15
      %s354 = scalar_select %p353, %s352, 15
      %s355 = smul.addr %s354, 8
      %s356 = scalar_lea.vmem %s9, %s355
      %s357 = smul.u32 8, %s20
      %v359 = vld [vmem:[%s344] sm:$0xf]
      %v360 = vld [vmem:[%s344 + $0x4] sm:$0xf]
      %v361 = vld [vmem:[%s344 + $0x8] sm:$0xf]
      %v362 = vld [vmem:[%s344 + $0xc] sm:$0xf]
      %v363 = vld [vmem:[%s344 + $0x10] sm:$0xf]
      %v364 = vld [vmem:[%s344 + $0x14] sm:$0xf]
      %v365 = vld [vmem:[%s344 + $0x18] sm:$0xf]
      %v366 = vld [vmem:[%s344 + $0x1c] sm:$0xf]
      %v367 = vld [vmem:[%s1] sm:$0xf]
      %v368 = vld [vmem:[%s1 + $0x4] sm:$0xf]
      %v369 = vld [vmem:[%s1 + $0x8] sm:$0xf]
      %v370 = vld [vmem:[%s1 + $0xc] sm:$0xf]
      %v371 = vld [vmem:[%s1 + $0x10] sm:$0xf]
      %v372 = vld [vmem:[%s1 + $0x14] sm:$0xf]
      %v373 = vld [vmem:[%s1 + $0x18] sm:$0xf]
      %v374 = vld [vmem:[%s1 + $0x1c] sm:$0xf]
      %v375 = vld [vmem:[%s1 + $0x20] sm:$0xf]
      %v376 = vmul.bf16 %v359, %v359
      %v377 = vmul.bf16 %v360, %v360
      %v378 = vmul.bf16 %v361, %v361
      %v379 = vmul.bf16 %v362, %v362
      %v380 = vmul.bf16 %v363, %v363
      %v381 = vmul.bf16 %v364, %v364
      %v382 = vmul.bf16 %v365, %v365
      %v383 = vmul.bf16 %v366, %v366
      %v384 = vld [vmem:[%s2] sm:$0xf]
      %v385 = vld [vmem:[%s2 + $0x4] sm:$0xf]
      %v386 = vld [vmem:[%s2 + $0x8] sm:$0xf]
      %v387 = vld [vmem:[%s2 + $0xc] sm:$0xf]
      %v388 = vld [vmem:[%s2 + $0x10] sm:$0xf]
      %v389 = vld [vmem:[%s2 + $0x14] sm:$0xf]
      %v390 = vld [vmem:[%s2 + $0x18] sm:$0xf]
      %v391 = vld [vmem:[%s2 + $0x1c] sm:$0xf]
      %v392 = vld [vmem:[%s2 + $0x20] sm:$0xf]
      %v401 = vunpack.c.l.b16 %v376
      %v402 = vunpack.c.l.b16 %v377
      %v403 = vunpack.c.l.b16 %v378
      %v404 = vunpack.c.l.b16 %v379
      %v405 = vunpack.c.l.b16 %v380
      %v406 = vunpack.c.l.b16 %v381
      %v407 = vunpack.c.l.b16 %v382
      %v408 = vunpack.c.l.b16 %v383
      %v409 = vpack.c.b16 %v402, %v401
      %v410 = vpack.c.b16 %v404, %v403
      %v411 = vpack.c.b16 %v406, %v405
      %v412 = vpack.c.b16 %v408, %v407
      %v422 = vunpack.c.l.b16 %v384
      %v423 = vunpack.c.l.b16 %v385
      %v424 = vunpack.c.l.b16 %v386
      %v425 = vunpack.c.l.b16 %v387
      %v426 = vunpack.c.l.b16 %v388
      %v427 = vunpack.c.l.b16 %v389
      %v428 = vunpack.c.l.b16 %v390
      %v429 = vunpack.c.l.b16 %v391
      %v430 = vunpack.c.l.b16 %v392
      %v431 = vpack.c.b16 %v423, %v422
      %v432 = vpack.c.b16 %v425, %v424
      %v433 = vpack.c.b16 %v427, %v426
      %v434 = vpack.c.b16 %v429, %v428
      %v435 = vpack.c.b16 %v430, %v430
      %vm440 = vcmask 588800
      %v442 = vsel %vm440, %v409, 0
      %v445 = vsel %vm440, %v410, 0
      %v448 = vsel %vm440, %v411, 0
      %v451 = vsel %vm440, %v412, 0
      %vm453 = vcmask 1043456
      %v455 = vsel %vm453, %v435, 0
      %457 = vmatprep.subr.bf16.mxu0 0
      %458 = vmatpush1.bf16.msra.mxu0 %v431
      %459 = vmatprep.subr.bf16.mxu0 0
      %460 = vmatpush1.bf16.msra.mxu0 %v432
      %461 = vmatprep.subr.bf16.mxu0 0
      %462 = vmatpush1.bf16.msra.mxu0 %v433
      %463 = vmatprep.subr.bf16.mxu0 0
      %464 = vmatpush1.bf16.msra.mxu0 %v434
      %465 = vmatprep.subr.bf16.mxu0 0
      %466 = vmatpush1.bf16.msra.mxu0 %v455
      %467 = vmatprep.subr.bf16.mxu0 0
      %468 = vmatpush1.bf16.msra.mxu0 0
      %469 = vmatprep.subr.bf16.mxu0 0
      %470 = vmatpush1.bf16.msra.mxu0 0
      %471 = vmatprep.subr.bf16.mxu0 0
      %472 = vmatpush1.bf16.msra.mxu0 0
      %473 = vmatprep.subr.bf16.mxu0 0
      %474 = vmatpush1.bf16.msra.mxu0 0
      %475 = vmatprep.subr.bf16.mxu0 0
      %476 = vmatpush1.bf16.msra.mxu0 0
      %477 = vmatprep.subr.bf16.mxu0 0
      %478 = vmatpush1.bf16.msra.mxu0 0
      %479 = vmatprep.subr.bf16.mxu0 0
      %480 = vmatpush1.bf16.msra.mxu0 0
      %481 = vmatprep.subr.bf16.mxu0 0
      %482 = vmatpush1.bf16.msra.mxu0 0
      %483 = vmatprep.subr.bf16.mxu0 0
      %484 = vmatpush1.bf16.msra.mxu0 0
      %485 = vmatprep.subr.bf16.mxu0 0
      %486 = vmatpush1.bf16.msra.mxu0 0
      %487 = vmatprep.subr.bf16.mxu0 0
      %488 = vmatpush1.bf16.msra.mxu0 0
      %489 = vmatprep.mubr.bf16.mxu0 0
      %490 = vmatmul.mubr.bf16.gmra.mrb[0].mxu0 %v442
      %v491 = vpop.f32.mrb[0].mxu0
      %v492 = vadd.f32 0.0, %v491
      %v493 = vpop.f32.mrb[0].mxu0
      %v494 = vpop.f32.mrb[0].mxu0
      %v495 = vadd.f32 0.0, %v494
      %v496 = vpop.f32.mrb[0].mxu0
      %497 = vmatprep.mubr.bf16.mxu0 0
      %498 = vmatmul.mubr.bf16.gmra.mrb[0].mxu0 %v445
      %v499 = vpop.f32.mrb[0].mxu0
      %v500 = vadd.f32 0.0, %v499
      %v501 = vpop.f32.mrb[0].mxu0
      %v502 = vpop.f32.mrb[0].mxu0
      %v503 = vadd.f32 0.0, %v502
      %v504 = vpop.f32.mrb[0].mxu0
      %505 = vmatprep.mubr.bf16.mxu0 0
      %506 = vmatmul.mubr.bf16.gmra.mrb[0].mxu0 %v448
      %v507 = vpop.f32.mrb[0].mxu0
      %v508 = vadd.f32 0.0, %v507
      %v509 = vpop.f32.mrb[0].mxu0
      %v510 = vpop.f32.mrb[0].mxu0
      %v511 = vadd.f32 0.0, %v510
      %v512 = vpop.f32.mrb[0].mxu0
      %513 = vmatprep.mubr.bf16.mxu0 0
      %514 = vmatmul.mubr.bf16.gmra.mrb[0].mxu0 %v451
      %v515 = vpop.f32.mrb[0].mxu0
      %v516 = vadd.f32 0.0, %v515
      %v517 = vpop.f32.mrb[0].mxu0
      %v518 = vpop.f32.mrb[0].mxu0
      %v519 = vadd.f32 0.0, %v518
      %v520 = vpop.f32.mrb[0].mxu0
      %521 = vdwg.mxu0
      %v522 = vld [vmem:[%s5] sm:$0xff]
      %vm523 = vcmask 64512
      %v525 = vsel %vm523, %v492, 0
      %v528 = vsel %vm523, %v495, 0
      %v531 = vsel %vm523, %v500, 0
      %v534 = vsel %vm523, %v503, 0
      %v537 = vsel %vm523, %v508, 0
      %v540 = vsel %vm523, %v511, 0
      %v543 = vsel %vm523, %v516, 0
      %v546 = vsel %vm523, %v519, 0
      %548 = vmatprep.subr.mxu0 0.0
      %549 = vmatpush1.msra.mxu0 %v522
      %550 = vmatprep.subr.mxu0 0.0
      %551 = vmatpush1.msra.mxu0 0.0
      %552 = vmatprep.subr.mxu0 0.0
      %553 = vmatpush1.msra.mxu0 0.0
      %554 = vmatprep.subr.mxu0 0.0
      %555 = vmatpush1.msra.mxu0 0.0
      %556 = vmatprep.subr.mxu0 0.0
      %557 = vmatpush1.msra.mxu0 0.0
      %558 = vmatprep.subr.mxu0 0.0
      %559 = vmatpush1.msra.mxu0 0.0
      %560 = vmatprep.subr.mxu0 0.0
      %561 = vmatpush1.msra.mxu0 0.0
      %562 = vmatprep.subr.mxu0 0.0
      %563 = vmatpush1.msra.mxu0 0.0
      %564 = vmatprep.subr.mxu0 0.0
      %565 = vmatpush1.msra.mxu0 0.0
      %566 = vmatprep.subr.mxu0 0.0
      %567 = vmatpush1.msra.mxu0 0.0
      %568 = vmatprep.subr.mxu0 0.0
      %569 = vmatpush1.msra.mxu0 0.0
      %570 = vmatprep.subr.mxu0 0.0
      %571 = vmatpush1.msra.mxu0 0.0
      %572 = vmatprep.subr.mxu0 0.0
      %573 = vmatpush1.msra.mxu0 0.0
      %574 = vmatprep.subr.mxu0 0.0
      %575 = vmatpush1.msra.mxu0 0.0
      %576 = vmatprep.subr.mxu0 0.0
      %577 = vmatpush1.msra.mxu0 0.0
      %578 = vmatprep.subr.mxu0 0.0
      %579 = vmatpush1.msra.mxu0 0.0
      %580 = vmatprep.subr.mxu0 0.0
      %581 = vmatpush1.msra.mxu0 0.0
      %582 = vmatprep.subr.mxu0 0.0
      %583 = vmatpush1.msra.mxu0 0.0
      %584 = vmatprep.subr.mxu0 0.0
      %585 = vmatpush1.msra.mxu0 0.0
      %586 = vmatprep.subr.mxu0 0.0
      %587 = vmatpush1.msra.mxu0 0.0
      %588 = vmatprep.subr.mxu0 0.0
      %589 = vmatpush1.msra.mxu0 0.0
      %590 = vmatprep.subr.mxu0 0.0
      %591 = vmatpush1.msra.mxu0 0.0
      %592 = vmatprep.subr.mxu0 0.0
      %593 = vmatpush1.msra.mxu0 0.0
      %594 = vmatprep.subr.mxu0 0.0
      %595 = vmatpush1.msra.mxu0 0.0
      %596 = vmatprep.subr.mxu0 0.0
      %597 = vmatpush1.msra.mxu0 0.0
      %598 = vmatprep.subr.mxu0 0.0
      %599 = vmatpush1.msra.mxu0 0.0
      %600 = vmatprep.subr.mxu0 0.0
      %601 = vmatpush1.msra.mxu0 0.0
      %602 = vmatprep.subr.mxu0 0.0
      %603 = vmatpush1.msra.mxu0 0.0
      %604 = vmatprep.subr.mxu0 0.0
      %605 = vmatpush1.msra.mxu0 0.0
      %606 = vmatprep.subr.mxu0 0.0
      %607 = vmatpush1.msra.mxu0 0.0
      %608 = vmatprep.subr.mxu0 0.0
      %609 = vmatpush1.msra.mxu0 0.0
      %610 = vmatprep.subr.mxu0 0.0
      %611 = vmatpush1.msra.mxu0 0.0
      %612 = vmatprep.mubr.f32.mxu0 0.0
      %613 = vmatmul.mubr.f32.gmra.mrb[0].mxu0 %v525
      %v614 = vpop.f32.mrb[0].mxu0
      %v615 = vadd.f32 0.0, %v614
      %v616 = vpop.f32.mrb[0].mxu0
      %617 = vmatprep.mubr.f32.mxu0 0.0
      %618 = vmatmul.mubr.f32.gmra.mrb[0].mxu0 %v528
      %v619 = vpop.f32.mrb[0].mxu0
      %v620 = vadd.f32 0.0, %v619
      %v621 = vpop.f32.mrb[0].mxu0
      %622 = vmatprep.mubr.f32.mxu0 0.0
      %623 = vmatmul.mubr.f32.gmra.mrb[0].mxu0 %v531
      %v624 = vpop.f32.mrb[0].mxu0
      %v625 = vadd.f32 0.0, %v624
      %v626 = vpop.f32.mrb[0].mxu0
      %627 = vmatprep.mubr.f32.mxu0 0.0
      %628 = vmatmul.mubr.f32.gmra.mrb[0].mxu0 %v534
      %v629 = vpop.f32.mrb[0].mxu0
      %v630 = vadd.f32 0.0, %v629
      %v631 = vpop.f32.mrb[0].mxu0
      %632 = vmatprep.mubr.f32.mxu0 0.0
      %633 = vmatmul.mubr.f32.gmra.mrb[0].mxu0 %v537
      %v634 = vpop.f32.mrb[0].mxu0
      %v635 = vadd.f32 0.0, %v634
      %v636 = vpop.f32.mrb[0].mxu0
      %637 = vmatprep.mubr.f32.mxu0 0.0
      %638 = vmatmul.mubr.f32.gmra.mrb[0].mxu0 %v540
      %v639 = vpop.f32.mrb[0].mxu0
      %v640 = vadd.f32 0.0, %v639
      %v641 = vpop.f32.mrb[0].mxu0
      %642 = vmatprep.mubr.f32.mxu0 0.0
      %643 = vmatmul.mubr.f32.gmra.mrb[0].mxu0 %v543
      %v644 = vpop.f32.mrb[0].mxu0
      %v645 = vadd.f32 0.0, %v644
      %v646 = vpop.f32.mrb[0].mxu0
      %647 = vmatprep.mubr.f32.mxu0 0.0
      %648 = vmatmul.mubr.f32.gmra.mrb[0].mxu0 %v546
      %v649 = vpop.f32.mrb[0].mxu0
      %v650 = vadd.f32 0.0, %v649
      %v651 = vpop.f32.mrb[0].mxu0
      %652 = vdwg.mxu0
      %v661 = vunpack.c.l.b16 %v359
      %v662 = vunpack.c.l.b16 %v360
      %v663 = vunpack.c.l.b16 %v361
      %v664 = vunpack.c.l.b16 %v362
      %v665 = vunpack.c.l.b16 %v363
      %v666 = vunpack.c.l.b16 %v364
      %v667 = vunpack.c.l.b16 %v365
      %v668 = vunpack.c.l.b16 %v366
      %v669 = vpack.c.b16 %v662, %v661
      %v670 = vpack.c.b16 %v664, %v663
      %v671 = vpack.c.b16 %v666, %v665
      %v672 = vpack.c.b16 %v668, %v667
      %v682 = vunpack.c.l.b16 %v367
      %v683 = vunpack.c.l.b16 %v368
      %v684 = vunpack.c.l.b16 %v369
      %v685 = vunpack.c.l.b16 %v370
      %v686 = vunpack.c.l.b16 %v371
      %v687 = vunpack.c.l.b16 %v372
      %v688 = vunpack.c.l.b16 %v373
      %v689 = vunpack.c.l.b16 %v374
      %v690 = vunpack.c.l.b16 %v375
      %v691 = vpack.c.b16 %v683, %v682
      %v692 = vpack.c.b16 %v685, %v684
      %v693 = vpack.c.b16 %v687, %v686
      %v694 = vpack.c.b16 %v689, %v688
      %v695 = vpack.c.b16 %v690, %v690
      %v701 = vsel %vm440, %v669, 0
      %v704 = vsel %vm440, %v670, 0
      %v707 = vsel %vm440, %v671, 0
      %v710 = vsel %vm440, %v672, 0
      %v713 = vsel %vm453, %v695, 0
      %715 = vmatprep.subr.bf16.mxu0 0
      %716 = vmatpush1.bf16.msra.mxu0 %v691
      %717 = vmatprep.subr.bf16.mxu0 0
      %718 = vmatpush1.bf16.msra.mxu0 %v692
      %719 = vmatprep.subr.bf16.mxu0 0
      %720 = vmatpush1.bf16.msra.mxu0 %v693
      %721 = vmatprep.subr.bf16.mxu0 0
      %722 = vmatpush1.bf16.msra.mxu0 %v694
      %723 = vmatprep.subr.bf16.mxu0 0
      %724 = vmatpush1.bf16.msra.mxu0 %v713
      %725 = vmatprep.subr.bf16.mxu0 0
      %726 = vmatpush1.bf16.msra.mxu0 0
      %727 = vmatprep.subr.bf16.mxu0 0
      %728 = vmatpush1.bf16.msra.mxu0 0
      %729 = vmatprep.subr.bf16.mxu0 0
      %730 = vmatpush1.bf16.msra.mxu0 0
      %731 = vmatprep.subr.bf16.mxu0 0
      %732 = vmatpush1.bf16.msra.mxu0 0
      %733 = vmatprep.subr.bf16.mxu0 0
      %734 = vmatpush1.bf16.msra.mxu0 0
      %735 = vmatprep.subr.bf16.mxu0 0
      %736 = vmatpush1.bf16.msra.mxu0 0
      %737 = vmatprep.subr.bf16.mxu0 0
      %738 = vmatpush1.bf16.msra.mxu0 0
      %739 = vmatprep.subr.bf16.mxu0 0
      %740 = vmatpush1.bf16.msra.mxu0 0
      %741 = vmatprep.subr.bf16.mxu0 0
      %742 = vmatpush1.bf16.msra.mxu0 0
      %743 = vmatprep.subr.bf16.mxu0 0
      %744 = vmatpush1.bf16.msra.mxu0 0
      %745 = vmatprep.subr.bf16.mxu0 0
      %746 = vmatpush1.bf16.msra.mxu0 0
      %747 = vmatprep.mubr.bf16.mxu0 0
      %748 = vmatmul.mubr.bf16.gmra.mrb[0].mxu0 %v701
      %v749 = vpop.f32.mrb[0].mxu0
      %v750 = vadd.f32 %v615, %v749
      %v751 = vpop.f32.mrb[0].mxu0
      %v752 = vpop.f32.mrb[0].mxu0
      %v753 = vadd.f32 %v620, %v752
      %v754 = vpop.f32.mrb[0].mxu0
      %755 = vmatprep.mubr.bf16.mxu0 0
      %756 = vmatmul.mubr.bf16.gmra.mrb[0].mxu0 %v704
      %v757 = vpop.f32.mrb[0].mxu0
      %v758 = vadd.f32 %v625, %v757
      %v759 = vpop.f32.mrb[0].mxu0
      %v760 = vpop.f32.mrb[0].mxu0
      %v761 = vadd.f32 %v630, %v760
      %v762 = vpop.f32.mrb[0].mxu0
      %763 = vmatprep.mubr.bf16.mxu0 0
      %764 = vmatmul.mubr.bf16.gmra.mrb[0].mxu0 %v707
      %v765 = vpop.f32.mrb[0].mxu0
      %v766 = vadd.f32 %v635, %v765
      %v767 = vpop.f32.mrb[0].mxu0
      %v768 = vpop.f32.mrb[0].mxu0
      %v769 = vadd.f32 %v640, %v768
      %v770 = vpop.f32.mrb[0].mxu0
      %771 = vmatprep.mubr.bf16.mxu0 0
      %772 = vmatmul.mubr.bf16.gmra.mrb[0].mxu0 %v710
      %v773 = vpop.f32.mrb[0].mxu0
      %v774 = vadd.f32 %v645, %v773
      %v775 = vpop.f32.mrb[0].mxu0
      %v776 = vpop.f32.mrb[0].mxu0
      %v777 = vadd.f32 %v650, %v776
      %v778 = vpop.f32.mrb[0].mxu0
      %779 = vdwg.mxu0
      %v780 = vld [vmem:[%s3] sm:$0x1]
      %v782 = vlaneseq
      %v783 = vshrl.u32 %v782, 7
      %v784 = vsub.s32 0, %v783
      %v785 = vrot.slane %v780, %v784
      %v787 = vadd.f32 %v750, %v785
      %v788 = vadd.f32 %v753, %v785
      %v789 = vadd.f32 %v758, %v785
      %v790 = vadd.f32 %v761, %v785
      %v791 = vadd.f32 %v766, %v785
      %v792 = vadd.f32 %v769, %v785
      %v793 = vadd.f32 %v774, %v785
      %v794 = vadd.f32 %v777, %v785
      %v795 = vmul.f32 %v787, 1.442695
      %v796 = vpow.pop %v795
      %v797 = vmul.f32 %v788, 1.442695
      %v798 = vpow.pop %v797
      %v799 = vmul.f32 %v789, 1.442695
      %v800 = vpow.pop %v799
      %v801 = vmul.f32 %v790, 1.442695
      %v802 = vpow.pop %v801
      %v803 = vmul.f32 %v791, 1.442695
      %v804 = vpow.pop %v803
      %v805 = vmul.f32 %v792, 1.442695
      %v806 = vpow.pop %v805
      %v807 = vmul.f32 %v793, 1.442695
      %v808 = vpow.pop %v807
      %v809 = vmul.f32 %v794, 1.442695
      %v810 = vpow.pop %v809
      %v811 = vld [vmem:[%s4] sm:$0xff]
      %v812 = vld [vmem:[%s4 + $0x8] sm:$0xff]
      %v813 = vld [vmem:[%s4 + $0x10] sm:$0xff]
      %v814 = vld [vmem:[%s4 + $0x18] sm:$0xff]
      %v815 = vld [vmem:[%s4 + $0x20] sm:$0xff]
      %v816 = vld [vmem:[%s4 + $0x28] sm:$0xff]
      %v817 = vld [vmem:[%s4 + $0x30] sm:$0xff]
      %v818 = vld [vmem:[%s4 + $0x38] sm:$0xff]
      %v819 = vld [vmem:[%s4 + $0x40] sm:$0xff]
      %v820 = vld [vmem:[%s4 + $0x48] sm:$0xff]
      %v821 = vld [vmem:[%s4 + $0x50] sm:$0xff]
      %v822 = vld [vmem:[%s4 + $0x58] sm:$0xff]
      %v823 = vld [vmem:[%s4 + $0x60] sm:$0xff]
      %v824 = vld [vmem:[%s4 + $0x68] sm:$0xff]
      %v825 = vld [vmem:[%s4 + $0x70] sm:$0xff]
      %v826 = vld [vmem:[%s4 + $0x78] sm:$0xff]
      %827 = vmatprep.subr.mxu0 0.0
      %828 = vmatpush1.msra.mxu0 %v811
      %829 = vmatprep.subr.mxu0 0.0
      %830 = vmatpush1.msra.mxu0 %v812
      %831 = vmatprep.subr.mxu0 0.0
      %832 = vmatpush1.msra.mxu0 %v813
      %833 = vmatprep.subr.mxu0 0.0
      %834 = vmatpush1.msra.mxu0 %v814
      %835 = vmatprep.subr.mxu0 0.0
      %836 = vmatpush1.msra.mxu0 %v815
      %837 = vmatprep.subr.mxu0 0.0
      %838 = vmatpush1.msra.mxu0 %v816
      %839 = vmatprep.subr.mxu0 0.0
      %840 = vmatpush1.msra.mxu0 %v817
      %841 = vmatprep.subr.mxu0 0.0
      %842 = vmatpush1.msra.mxu0 %v818
      %843 = vmatprep.subr.mxu0 0.0
      %844 = vmatpush1.msra.mxu0 %v819
      %845 = vmatprep.subr.mxu0 0.0
      %846 = vmatpush1.msra.mxu0 %v820
      %847 = vmatprep.subr.mxu0 0.0
      %848 = vmatpush1.msra.mxu0 %v821
      %849 = vmatprep.subr.mxu0 0.0
      %850 = vmatpush1.msra.mxu0 %v822
      %851 = vmatprep.subr.mxu0 0.0
      %852 = vmatpush1.msra.mxu0 %v823
      %853 = vmatprep.subr.mxu0 0.0
      %854 = vmatpush1.msra.mxu0 %v824
      %855 = vmatprep.subr.mxu0 0.0
      %856 = vmatpush1.msra.mxu0 %v825
      %857 = vmatprep.subr.mxu0 0.0
      %858 = vmatpush1.msra.mxu0 %v826
      %859 = vmatprep.subr.mxu0 0.0
      %860 = vmatpush1.msra.mxu0 0.0
      %861 = vmatprep.subr.mxu0 0.0
      %862 = vmatpush1.msra.mxu0 0.0
      %863 = vmatprep.subr.mxu0 0.0
      %864 = vmatpush1.msra.mxu0 0.0
      %865 = vmatprep.subr.mxu0 0.0
      %866 = vmatpush1.msra.mxu0 0.0
      %867 = vmatprep.subr.mxu0 0.0
      %868 = vmatpush1.msra.mxu0 0.0
      %869 = vmatprep.subr.mxu0 0.0
      %870 = vmatpush1.msra.mxu0 0.0
      %871 = vmatprep.subr.mxu0 0.0
      %872 = vmatpush1.msra.mxu0 0.0
      %873 = vmatprep.subr.mxu0 0.0
      %874 = vmatpush1.msra.mxu0 0.0
      %875 = vmatprep.subr.mxu0 0.0
      %876 = vmatpush1.msra.mxu0 0.0
      %877 = vmatprep.subr.mxu0 0.0
      %878 = vmatpush1.msra.mxu0 0.0
      %879 = vmatprep.subr.mxu0 0.0
      %880 = vmatpush1.msra.mxu0 0.0
      %881 = vmatprep.subr.mxu0 0.0
      %882 = vmatpush1.msra.mxu0 0.0
      %883 = vmatprep.subr.mxu0 0.0
      %884 = vmatpush1.msra.mxu0 0.0
      %885 = vmatprep.subr.mxu0 0.0
      %886 = vmatpush1.msra.mxu0 0.0
      %887 = vmatprep.subr.mxu0 0.0
      %888 = vmatpush1.msra.mxu0 0.0
      %889 = vmatprep.subr.mxu0 0.0
      %890 = vmatpush1.msra.mxu0 0.0
      %891 = vmatprep.mubr.f32.mxu0 0.0
      %892 = vmatmul.mubr.f32.gmra.mrb[0].mxu0 %v796
      %v893 = vpop.f32.mrb[0].mxu0
      %v894 = vadd.f32 0.0, %v893
      %v895 = vpop.f32.mrb[0].mxu0
      %896 = vmatprep.mubr.f32.mxu0 0.0
      %897 = vmatmul.mubr.f32.gmra.mrb[0].mxu0 %v798
      %v898 = vpop.f32.mrb[0].mxu0
      %v899 = vadd.f32 0.0, %v898
      %v900 = vpop.f32.mrb[0].mxu0
      %901 = vmatprep.mubr.f32.mxu0 0.0
      %902 = vmatmul.mubr.f32.gmra.mrb[0].mxu0 %v800
      %v903 = vpop.f32.mrb[0].mxu0
      %v904 = vadd.f32 0.0, %v903
      %v905 = vpop.f32.mrb[0].mxu0
      %906 = vmatprep.mubr.f32.mxu0 0.0
      %907 = vmatmul.mubr.f32.gmra.mrb[0].mxu0 %v802
      %v908 = vpop.f32.mrb[0].mxu0
      %v909 = vadd.f32 0.0, %v908
      %v910 = vpop.f32.mrb[0].mxu0
      %911 = vmatprep.mubr.f32.mxu0 0.0
      %912 = vmatmul.mubr.f32.gmra.mrb[0].mxu0 %v804
      %v913 = vpop.f32.mrb[0].mxu0
      %v914 = vadd.f32 0.0, %v913
      %v915 = vpop.f32.mrb[0].mxu0
      %916 = vmatprep.mubr.f32.mxu0 0.0
      %917 = vmatmul.mubr.f32.gmra.mrb[0].mxu0 %v806
      %v918 = vpop.f32.mrb[0].mxu0
      %v919 = vadd.f32 0.0, %v918
      %v920 = vpop.f32.mrb[0].mxu0
      %921 = vmatprep.mubr.f32.mxu0 0.0
      %922 = vmatmul.mubr.f32.gmra.mrb[0].mxu0 %v808
      %v923 = vpop.f32.mrb[0].mxu0
      %v924 = vadd.f32 0.0, %v923
      %v925 = vpop.f32.mrb[0].mxu0
      %926 = vmatprep.mubr.f32.mxu0 0.0
      %927 = vmatmul.mubr.f32.gmra.mrb[0].mxu0 %v810
      %v928 = vpop.f32.mrb[0].mxu0
      %v929 = vadd.f32 0.0, %v928
      %v930 = vpop.f32.mrb[0].mxu0
      %931 = vdwg.mxu0
      %v932 = vmax.f32 %v894, 1.1754944e-38
      %v933 = vmax.f32 %v899, 1.1754944e-38
      %v934 = vmax.f32 %v904, 1.1754944e-38
      %v935 = vmax.f32 %v909, 1.1754944e-38
      %v936 = vmax.f32 %v914, 1.1754944e-38
      %v937 = vmax.f32 %v919, 1.1754944e-38
      %v938 = vmax.f32 %v924, 1.1754944e-38
      %v939 = vmax.f32 %v929, 1.1754944e-38
      %v940 = vrcp.pop %v932
      %v941 = vrcp.pop %v933
      %v942 = vrcp.pop %v934
      %v943 = vrcp.pop %v935
      %v944 = vrcp.pop %v936
      %v945 = vrcp.pop %v937
      %v946 = vrcp.pop %v938
      %v947 = vrcp.pop %v939
      %v949 = vsel %vm523, %v940, 0
      %v952 = vsel %vm523, %v941, 0
      %v955 = vsel %vm523, %v942, 0
      %v958 = vsel %vm523, %v943, 0
      %v961 = vsel %vm523, %v944, 0
      %v964 = vsel %vm523, %v945, 0
      %v967 = vsel %vm523, %v946, 0
      %v970 = vsel %vm523, %v947, 0
      %972 = vmatprep.subr.mxu0 0.0
      %973 = vmatpush1.msra.mxu0 %v522
      %974 = vmatprep.subr.mxu0 0.0
      %975 = vmatpush1.msra.mxu0 0.0
      %976 = vmatprep.subr.mxu0 0.0
      %977 = vmatpush1.msra.mxu0 0.0
      %978 = vmatprep.subr.mxu0 0.0
      %979 = vmatpush1.msra.mxu0 0.0
      %980 = vmatprep.subr.mxu0 0.0
      %981 = vmatpush1.msra.mxu0 0.0
      %982 = vmatprep.subr.mxu0 0.0
      %983 = vmatpush1.msra.mxu0 0.0
      %984 = vmatprep.subr.mxu0 0.0
      %985 = vmatpush1.msra.mxu0 0.0
      %986 = vmatprep.subr.mxu0 0.0
      %987 = vmatpush1.msra.mxu0 0.0
      %988 = vmatprep.subr.mxu0 0.0
      %989 = vmatpush1.msra.mxu0 0.0
      %990 = vmatprep.subr.mxu0 0.0
      %991 = vmatpush1.msra.mxu0 0.0
      %992 = vmatprep.subr.mxu0 0.0
      %993 = vmatpush1.msra.mxu0 0.0
      %994 = vmatprep.subr.mxu0 0.0
      %995 = vmatpush1.msra.mxu0 0.0
      %996 = vmatprep.subr.mxu0 0.0
      %997 = vmatpush1.msra.mxu0 0.0
      %998 = vmatprep.subr.mxu0 0.0
      %999 = vmatpush1.msra.mxu0 0.0
      %1000 = vmatprep.subr.mxu0 0.0
      %1001 = vmatpush1.msra.mxu0 0.0
      %1002 = vmatprep.subr.mxu0 0.0
      %1003 = vmatpush1.msra.mxu0 0.0
      %1004 = vmatprep.subr.mxu0 0.0
      %1005 = vmatpush1.msra.mxu0 0.0
      %1006 = vmatprep.subr.mxu0 0.0
      %1007 = vmatpush1.msra.mxu0 0.0
      %1008 = vmatprep.subr.mxu0 0.0
      %1009 = vmatpush1.msra.mxu0 0.0
      %1010 = vmatprep.subr.mxu0 0.0
      %1011 = vmatpush1.msra.mxu0 0.0
      %1012 = vmatprep.subr.mxu0 0.0
      %1013 = vmatpush1.msra.mxu0 0.0
      %1014 = vmatprep.subr.mxu0 0.0
      %1015 = vmatpush1.msra.mxu0 0.0
      %1016 = vmatprep.subr.mxu0 0.0
      %1017 = vmatpush1.msra.mxu0 0.0
      %1018 = vmatprep.subr.mxu0 0.0
      %1019 = vmatpush1.msra.mxu0 0.0
      %1020 = vmatprep.subr.mxu0 0.0
      %1021 = vmatpush1.msra.mxu0 0.0
      %1022 = vmatprep.subr.mxu0 0.0
      %1023 = vmatpush1.msra.mxu0 0.0
      %1024 = vmatprep.subr.mxu0 0.0
      %1025 = vmatpush1.msra.mxu0 0.0
      %1026 = vmatprep.subr.mxu0 0.0
      %1027 = vmatpush1.msra.mxu0 0.0
      %1028 = vmatprep.subr.mxu0 0.0
      %1029 = vmatpush1.msra.mxu0 0.0
      %1030 = vmatprep.subr.mxu0 0.0
      %1031 = vmatpush1.msra.mxu0 0.0
      %1032 = vmatprep.subr.mxu0 0.0
      %1033 = vmatpush1.msra.mxu0 0.0
      %1034 = vmatprep.subr.mxu0 0.0
      %1035 = vmatpush1.msra.mxu0 0.0
      %1036 = vmatprep.mubr.f32.mxu0 0.0
      %1037 = vmatmul.mubr.f32.gmra.mrb[0].mxu0 %v949
      %v1038 = vpop.f32.mrb[0].mxu0
      %v1039 = vadd.f32 0.0, %v1038
      %v1040 = vpop.f32.mrb[0].mxu0
      %1041 = vmatprep.mubr.f32.mxu0 0.0
      %1042 = vmatmul.mubr.f32.gmra.mrb[0].mxu0 %v952
      %v1043 = vpop.f32.mrb[0].mxu0
      %v1044 = vadd.f32 0.0, %v1043
      %v1045 = vpop.f32.mrb[0].mxu0
      %1046 = vmatprep.mubr.f32.mxu0 0.0
      %1047 = vmatmul.mubr.f32.gmra.mrb[0].mxu0 %v955
      %v1048 = vpop.f32.mrb[0].mxu0
      %v1049 = vadd.f32 0.0, %v1048
      %v1050 = vpop.f32.mrb[0].mxu0
      %1051 = vmatprep.mubr.f32.mxu0 0.0
      %1052 = vmatmul.mubr.f32.gmra.mrb[0].mxu0 %v958
      %v1053 = vpop.f32.mrb[0].mxu0
      %v1054 = vadd.f32 0.0, %v1053
      %v1055 = vpop.f32.mrb[0].mxu0
      %1056 = vmatprep.mubr.f32.mxu0 0.0
      %1057 = vmatmul.mubr.f32.gmra.mrb[0].mxu0 %v961
      %v1058 = vpop.f32.mrb[0].mxu0
      %v1059 = vadd.f32 0.0, %v1058
      %v1060 = vpop.f32.mrb[0].mxu0
      %1061 = vmatprep.mubr.f32.mxu0 0.0
      %1062 = vmatmul.mubr.f32.gmra.mrb[0].mxu0 %v964
      %v1063 = vpop.f32.mrb[0].mxu0
      %v1064 = vadd.f32 0.0, %v1063
      %v1065 = vpop.f32.mrb[0].mxu0
      %1066 = vmatprep.mubr.f32.mxu0 0.0
      %1067 = vmatmul.mubr.f32.gmra.mrb[0].mxu0 %v967
      %v1068 = vpop.f32.mrb[0].mxu0
      %v1069 = vadd.f32 0.0, %v1068
      %v1070 = vpop.f32.mrb[0].mxu0
      %1071 = vmatprep.mubr.f32.mxu0 0.0
      %1072 = vmatmul.mubr.f32.gmra.mrb[0].mxu0 %v970
      %v1073 = vpop.f32.mrb[0].mxu0
      %v1074 = vadd.f32 0.0, %v1073
      %v1075 = vpop.f32.mrb[0].mxu0
      %1076 = vdwg.mxu0
      %v1077 = vmul.f32 %v796, %v1039
      %v1078 = vmul.f32 %v798, %v1044
      %v1079 = vmul.f32 %v800, %v1049
      %v1080 = vmul.f32 %v802, %v1054
      %v1081 = vmul.f32 %v804, %v1059
      %v1082 = vmul.f32 %v806, %v1064
      %v1083 = vmul.f32 %v808, %v1069
      %v1084 = vmul.f32 %v810, %v1074
      %v1085 = vpack.c.bf16 %v1078, %v1077
      %v1086 = vpack.c.bf16 %v1080, %v1079
      %v1087 = vpack.c.bf16 %v1082, %v1081
      %v1088 = vpack.c.bf16 %v1084, %v1083
      %v1089 = vld [vmem:[%s6] sm:$0xf]
      %v1090 = vld [vmem:[%s6 + $0x4] sm:$0xf]
      %v1091 = vld [vmem:[%s6 + $0x8] sm:$0xf]
      %v1092 = vld [vmem:[%s6 + $0xc] sm:$0xf]
      %v1093 = vld [vmem:[%s6 + $0x10] sm:$0xf]
      %v1094 = vld [vmem:[%s6 + $0x14] sm:$0xf]
      %v1095 = vld [vmem:[%s6 + $0x18] sm:$0xf]
      %v1096 = vld [vmem:[%s6 + $0x1c] sm:$0xf]
      %v1097 = vld [vmem:[%s6 + $0x20] sm:$0xf]
      %v1098 = vld [vmem:[%s6 + $0x24] sm:$0xf]
      %v1099 = vld [vmem:[%s6 + $0x28] sm:$0xf]
      %v1100 = vld [vmem:[%s6 + $0x2c] sm:$0xf]
      %v1101 = vld [vmem:[%s6 + $0x30] sm:$0xf]
      %v1102 = vld [vmem:[%s6 + $0x34] sm:$0xf]
      %v1103 = vld [vmem:[%s6 + $0x38] sm:$0xf]
      %v1104 = vld [vmem:[%s6 + $0x3c] sm:$0xf]
      %v1105 = vld [vmem:[%s7] sm:$0x1]
      %v1107 = vlaneseq
      %v1108 = vshrl.u32 %v1107, 7
      %v1109 = vsub.s32 0, %v1108
      %v1110 = vrot.slane %v1105, %v1109
      %v1128 = vunpack.c.l.b16 %v1089
      %v1129 = vunpack.c.l.b16 %v1090
      %v1130 = vunpack.c.l.b16 %v1091
      %v1131 = vunpack.c.l.b16 %v1092
      %v1132 = vunpack.c.l.b16 %v1093
      %v1133 = vunpack.c.l.b16 %v1094
      %v1134 = vunpack.c.l.b16 %v1095
      %v1135 = vunpack.c.l.b16 %v1096
      %v1136 = vunpack.c.l.b16 %v1097
      %v1137 = vunpack.c.l.b16 %v1098
      %v1138 = vunpack.c.l.b16 %v1099
      %v1139 = vunpack.c.l.b16 %v1100
      %v1140 = vunpack.c.l.b16 %v1101
      %v1141 = vunpack.c.l.b16 %v1102
      %v1142 = vunpack.c.l.b16 %v1103
      %v1143 = vunpack.c.l.b16 %v1104
      %v1144 = vpack.c.b16 %v1129, %v1128
      %v1145 = vpack.c.b16 %v1131, %v1130
      %v1146 = vpack.c.b16 %v1133, %v1132
      %v1147 = vpack.c.b16 %v1135, %v1134
      %v1148 = vpack.c.b16 %v1137, %v1136
      %v1149 = vpack.c.b16 %v1139, %v1138
      %v1150 = vpack.c.b16 %v1141, %v1140
      %v1151 = vpack.c.b16 %v1143, %v1142
      %1160 = vmatprep.subr.bf16.mxu0 0
      %1161 = vmatpush1.bf16.msra.mxu0 %v1144
      %1162 = vmatprep.subr.bf16.mxu0 0
      %1163 = vmatpush1.bf16.msra.mxu0 %v1145
      %1164 = vmatprep.subr.bf16.mxu0 0
      %1165 = vmatpush1.bf16.msra.mxu0 %v1146
      %1166 = vmatprep.subr.bf16.mxu0 0
      %1167 = vmatpush1.bf16.msra.mxu0 %v1147
      %1168 = vmatprep.subr.bf16.mxu0 0
      %1169 = vmatpush1.bf16.msra.mxu0 %v1148
      %1170 = vmatprep.subr.bf16.mxu0 0
      %1171 = vmatpush1.bf16.msra.mxu0 %v1149
      %1172 = vmatprep.subr.bf16.mxu0 0
      %1173 = vmatpush1.bf16.msra.mxu0 %v1150
      %1174 = vmatprep.subr.bf16.mxu0 0
      %1175 = vmatpush1.bf16.msra.mxu0 %v1151
      %1176 = vmatprep.subr.bf16.mxu0 0
      %1177 = vmatpush1.bf16.msra.mxu0 0
      %1178 = vmatprep.subr.bf16.mxu0 0
      %1179 = vmatpush1.bf16.msra.mxu0 0
      %1180 = vmatprep.subr.bf16.mxu0 0
      %1181 = vmatpush1.bf16.msra.mxu0 0
      %1182 = vmatprep.subr.bf16.mxu0 0
      %1183 = vmatpush1.bf16.msra.mxu0 0
      %1184 = vmatprep.subr.bf16.mxu0 0
      %1185 = vmatpush1.bf16.msra.mxu0 0
      %1186 = vmatprep.subr.bf16.mxu0 0
      %1187 = vmatpush1.bf16.msra.mxu0 0
      %1188 = vmatprep.subr.bf16.mxu0 0
      %1189 = vmatpush1.bf16.msra.mxu0 0
      %1190 = vmatprep.subr.bf16.mxu0 0
      %1191 = vmatpush1.bf16.msra.mxu0 0
      %1192 = vmatprep.mubr.bf16.mxu0 0
      %1193 = vmatmul.mubr.bf16.gmra.mrb[0].mxu0 %v1085
      %v1194 = vpop.f32.mrb[0].mxu0
      %v1195 = vadd.f32 %v1110, %v1194
      %v1196 = vpop.f32.mrb[0].mxu0
      %v1197 = vpop.f32.mrb[0].mxu0
      %v1198 = vadd.f32 %v1110, %v1197
      %v1199 = vpop.f32.mrb[0].mxu0
      %1200 = vmatprep.mubr.bf16.mxu0 0
      %1201 = vmatmul.mubr.bf16.gmra.mrb[0].mxu0 %v1086
      %v1202 = vpop.f32.mrb[0].mxu0
      %v1203 = vadd.f32 %v1110, %v1202
      %v1204 = vpop.f32.mrb[0].mxu0
      %v1205 = vpop.f32.mrb[0].mxu0
      %v1206 = vadd.f32 %v1110, %v1205
      %v1207 = vpop.f32.mrb[0].mxu0
      %1208 = vmatprep.mubr.bf16.mxu0 0
      %1209 = vmatmul.mubr.bf16.gmra.mrb[0].mxu0 %v1087
      %v1210 = vpop.f32.mrb[0].mxu0
      %v1211 = vadd.f32 %v1110, %v1210
      %v1212 = vpop.f32.mrb[0].mxu0
      %v1213 = vpop.f32.mrb[0].mxu0
      %v1214 = vadd.f32 %v1110, %v1213
      %v1215 = vpop.f32.mrb[0].mxu0
      %1216 = vmatprep.mubr.bf16.mxu0 0
      %1217 = vmatmul.mubr.bf16.gmra.mrb[0].mxu0 %v1088
      %v1218 = vpop.f32.mrb[0].mxu0
      %v1219 = vadd.f32 %v1110, %v1218
      %v1220 = vpop.f32.mrb[0].mxu0
      %v1221 = vpop.f32.mrb[0].mxu0
      %v1222 = vadd.f32 %v1110, %v1221
      %v1223 = vpop.f32.mrb[0].mxu0
      %1224 = vdwg.mxu0
      %v1225 = vld [vmem:[%s350] sm:$0xff]
      %v1226 = vld [vmem:[%s350 + $0x8] sm:$0xff]
      %v1227 = vld [vmem:[%s350 + $0x10] sm:$0xff]
      %v1228 = vld [vmem:[%s350 + $0x18] sm:$0xff]
      %v1229 = vld [vmem:[%s350 + $0x20] sm:$0xff]
      %v1230 = vld [vmem:[%s350 + $0x28] sm:$0xff]
      %v1231 = vld [vmem:[%s350 + $0x30] sm:$0xff]
      %v1232 = vld [vmem:[%s350 + $0x38] sm:$0xff]
      %v1233 = vadd.f32 %v1195, %v1225
      %v1234 = vadd.f32 %v1198, %v1226
      %v1235 = vadd.f32 %v1203, %v1227
      %v1236 = vadd.f32 %v1206, %v1228
      %v1237 = vadd.f32 %v1211, %v1229
      %v1238 = vadd.f32 %v1214, %v1230
      %v1239 = vadd.f32 %v1219, %v1231
      %v1240 = vadd.f32 %v1222, %v1232
      %v1241 = vmax.f32 %v1233, 0.0
      %v1242 = vmax.f32 %v1234, 0.0
      %v1243 = vmax.f32 %v1235, 0.0
      %v1244 = vmax.f32 %v1236, 0.0
      %v1245 = vmax.f32 %v1237, 0.0
      %v1246 = vmax.f32 %v1238, 0.0
      %v1247 = vmax.f32 %v1239, 0.0
      %v1248 = vmax.f32 %v1240, 0.0
      %1249 = vst [vmem:[%s356] sm:$0xff] %v1241
      %1250 = vst [vmem:[%s356 + $0x8] sm:$0xff] %v1242
      %1251 = vst [vmem:[%s356 + $0x10] sm:$0xff] %v1243
      %1252 = vst [vmem:[%s356 + $0x18] sm:$0xff] %v1244
      %1253 = vst [vmem:[%s356 + $0x20] sm:$0xff] %v1245
      %1254 = vst [vmem:[%s356 + $0x28] sm:$0xff] %v1246
      %1255 = vst [vmem:[%s356 + $0x30] sm:$0xff] %v1247
      %1256 = vst [vmem:[%s356 + $0x38] sm:$0xff] %v1248
      %s1257 = smul.u32 8, %s20
      %p1258 = scmp.lt.s32.totalorder %s1257, 15
      %s1259 = scalar_select %p1258, %s1257, 15
      %s1260 = smul.addr %s1259, 8
      %s1261 = scalar_lea.vmem %s9, %s1260
      // Predicated region
      $region57: #{amm_basic_block.3} parent=55 // pred_check
        %p1262 = pneg %p237
      $region58: #{amm_basic_block.3} parent=55 // pred_check_branch
        %1264 = sbr.rel (%p1262) target = $region60
      $region59: #{amm_basic_block.3} parent=55 // pred_region
        %s1265 = smul.u32 8, %s20
      $region60: #{amm_basic_block.3} parent=55 // pred_fallthru
        _
    $region56: #{amm_basic_block.3} parent=5 // pred_fallthru
      _
    %p1266 = scmp.le.s32.totalorder 2, %s15
    // Predicated region
    $region61: #{amm_basic_block.3} parent=5 // pred_check
      %p1267 = pneg %p1266
    $region62: #{amm_basic_block.3} parent=5 // pred_check_branch
      %1269 = sbr.rel (%p1267) target = $region64
    $region63: #{amm_basic_block.3} parent=5 // pred_region
      %s1270 = ssub.s32 %s15, 2
      // Predicated region
      $region65: #{amm_basic_block.3} parent=63 // pred_check
        %p1271 = pneg %p243
      $region66: #{amm_basic_block.3} parent=63 // pred_check_branch
        %1273 = sbr.rel (%p1271) target = $region68
      $region67: #{amm_basic_block.3} parent=63 // pred_region
        %s1274 = smul.u32 8, %s21
        %p1275 = scmp.lt.s32.totalorder %s1274, 15
        %s1276 = scalar_select %p1275, %s1274, 15
        %s1277 = smul.addr %s1276, 8
        %s1278 = scalar_lea.vmem %s9, %s1277
      $region68: #{amm_basic_block.3} parent=63 // pred_fallthru
        _
    $region64: #{amm_basic_block.3} parent=5 // pred_fallthru
      _
  $region6: #{amm_basic_block.3} parent=0 // loop_footer
    %s19 = sadd.s32 1, %s15
  $region7: #{amm_basic_block.3} parent=0 // loop_footer_branch
    %14 = sbr.rel target = $region3
  $region8: #{amm_basic_block.3} parent=0 // loop_exit
    _

</llo_original>
